<compile_context>
chip_gen: v5e
topology: v5e:2x2
jax: 0.10.0
libtpu: 0.0.40
codegen_flags: <defaults>
</compile_context>

<pallas_src>
import jax
import jax.numpy as jnp
from jax import lax
from jax.experimental import pallas as pl
from jax.experimental.pallas import tpu as pltpu

# ---- model hyper-params (nn.Module __init__ shapes) -------------------------
D = 32            # input_dim
H = 4             # num_heads
HEAD_DIM = D // H
FF = 4 * D        # feed_forward_dim
LAYERS = 4        # layer_num (same AttentionLayer applied 4 times)
T = 8             # sequence length
B = 2             # batch
M = B * T
VOCAB_TIME = 48   # time_embedding rows
EPS = 1e-5        # nn.LayerNorm default eps
NEG = -1e30       # additive mask for cross-batch score entries


def _shift(n):
    assert n > 0 and (n & (n - 1)) == 0, "power-of-two expected"
    return n.bit_length() - 1


def _layernorm(x, gamma, beta):
    mu = jnp.mean(x, axis=-1, keepdims=True)
    var = jnp.mean((x - mu) ** 2, axis=-1, keepdims=True)
    return (x - mu) * lax.rsqrt(var + EPS) * gamma + beta


# ---------------------------- fused Pallas kernel -----------------------------
def fused_seq_kernel(x_ref, hist_ref, emb_ref,
                     wqkv_ref, bqkv_ref, wo_ref, bo_ref,
                     w1_ref, b1_ref, w2_ref, b2_ref,
                     g1_ref, be1_ref, g2_ref, be2_ref,
                     wp_ref, bp_ref,
                     o_ref):
    f32 = jnp.float32

    # ---- time embedding: one-hot matmul instead of dynamic row gathers ------
    hist = hist_ref[...]                                          # (T, 1) int32
    vocab_ids = lax.broadcasted_iota(jnp.int32, (T, VOCAB_TIME), 1)
    onehot = (vocab_ids == hist).astype(f32)                      # (T, VOCAB)
    te = jnp.dot(onehot, emb_ref[...], preferred_element_type=f32)  # (T, D)
    x = x_ref[...] + jnp.concatenate([te] * B, axis=0)            # (M, D)

    # ---- masks built once on the VPU (iota/shift/compare), no lane slicing --
    HM = H * M
    r_head = lax.broadcasted_iota(jnp.int32, (HM, D), 0) >> _shift(M)
    c_head = lax.broadcasted_iota(jnp.int32, (HM, D), 1) >> _shift(HEAD_DIM)
    headmask = (r_head == c_head).astype(f32)                     # (H*M, D)
    r_b = lax.broadcasted_iota(jnp.int32, (M, HM), 0) >> _shift(T)
    c_b = (lax.broadcasted_iota(jnp.int32, (M, HM), 1) & (M - 1)) >> _shift(T)
    batch_bias = jnp.where(r_b == c_b, f32(0.0), f32(NEG))        # (M, H*M)

    # ---- hoist weight loads out of the 4x layer unroll ----------------------
    wqkv = wqkv_ref[...]; bqkv = bqkv_ref[...]                    # scale folded
    wo = wo_ref[...]; bo = bo_ref[...]
    w1 = w1_ref[...]; b1 = b1_ref[...]
    w2 = w2_ref[...]; b2 = b2_ref[...]
    g1 = g1_ref[...]; be1 = be1_ref[...]
    g2 = g2_ref[...]; be2 = be2_ref[...]

    for _ in range(LAYERS):                    # static unroll; shared weights
        # fused QKV projection (1 MXU push); 1/sqrt(head_dim) pre-folded in wq
        qkv = jnp.dot(x, wqkv, preferred_element_type=f32) + bqkv   # (M, 3D)
        q = qkv[:, 0 * D:1 * D]
        k = qkv[:, 1 * D:2 * D]
        v = qkv[:, 2 * D:3 * D]

        # head-masked K/V stacks: row h*M+m holds k[m]/v[m] on head-h lanes only
        k_cat = jnp.concatenate([k] * H, axis=0) * headmask        # (H*M, D)
        v_cat = jnp.concatenate([v] * H, axis=0) * headmask        # (H*M, D)

        # all batches & heads in one score matmul; cross-batch entries masked
        s = lax.dot_general(q, k_cat, (((1,), (1,)), ((), ())),
                            preferred_element_type=f32)            # (M, H*M)
        s = s + batch_bias
        s = s - jnp.max(s, axis=-1, keepdims=True)
        p = jnp.exp(s)                                             # masked -> 0
        # per-head softmax denominators, already broadcast to head lanes
        denom = jnp.dot(p, headmask, preferred_element_type=f32)   # (M, D)
        ctx = jnp.dot(p, v_cat, preferred_element_type=f32)        # (M, D)
        ctx = ctx * pl.reciprocal(denom, approx=False)             # exact divide
        attn_out = jnp.dot(ctx, wo, preferred_element_type=f32) + bo

        # dropout1 / dropout2: identity (eval semantics)
        h1 = _layernorm(x + attn_out, g1, be1)
        ff = jnp.maximum(jnp.dot(h1, w1, preferred_element_type=f32) + b1, 0.0)
        ff = jnp.dot(ff, w2, preferred_element_type=f32) + b2
        x = _layernorm(h1 + ff, g2, be2)

    # predict on the whole slab (dense store); last-timestep slice done outside
    o_ref[...] = jnp.dot(x, wp_ref[...], preferred_element_type=f32) + bp_ref[...]


# ---------------------------- wrapper ------------------------------------------
def pack_params(params):
    """One-time packing (outside the per-call path): fuse QKV and fold scale."""
    (wq, bq, wk, bk, wv, bv, wo, bo,
     w1, b1, w2, b2, g1, be1, g2, be2) = params["attn"]
    scale = 1.0 / (HEAD_DIM ** 0.5)
    return {
        "emb": params["emb"],
        "wqkv": jnp.concatenate([wq * scale, wk, wv], axis=1),   # (D, 3D)
        "bqkv": jnp.concatenate([bq * scale, bk, bv], axis=1),   # (1, 3D)
        "wo": wo, "bo": bo, "w1": w1, "b1": b1, "w2": w2, "b2": b2,
        "g1": g1, "be1": be1, "g2": g2, "be2": be2,
        "pred_w": params["pred_w"], "pred_b": params["pred_b"],
    }


def sequence_forward(x, history_time_encoding, kparams):
    Bn, Tn, Dn = x.shape
    x2d = x.reshape(Bn * Tn, Dn)                       # fold B*T into one M dim
    hist2d = history_time_encoding.reshape(Tn, 1).astype(jnp.int32)
    ins = (x2d, hist2d, kparams["emb"], kparams["wqkv"], kparams["bqkv"],
           kparams["wo"], kparams["bo"], kparams["w1"], kparams["b1"],
           kparams["w2"], kparams["b2"], kparams["g1"], kparams["be1"],
           kparams["g2"], kparams["be2"], kparams["pred_w"], kparams["pred_b"])

    def full_spec(a):
        return pl.BlockSpec(a.shape, lambda i: (0,) * a.ndim)

    y2d = pl.pallas_call(
        fused_seq_kernel,
        out_shape=jax.ShapeDtypeStruct((Bn * Tn, Dn), jnp.float32),
        grid=(1,),                                     # whole model = 1 step
        in_specs=[full_spec(a) for a in ins],
        out_specs=pl.BlockSpec((Bn * Tn, Dn), lambda i: (0, 0)),
        compiler_params=pltpu.CompilerParams(dimension_semantics=("arbitrary",)),
    )(*ins)
    # `predict` applied to every row in-kernel; pick the last timestep here.
    return y2d.reshape(Bn, Tn, Dn)[:, -1:, :]          # (B, 1, D)


# ---------------------------- reference (pure JAX) ------------------------------
def ref_forward(x, hist, params):
    def ln(y, g, b):
        mu = y.mean(-1, keepdims=True)
        var = ((y - mu) ** 2).mean(-1, keepdims=True)
        return (y - mu) / jnp.sqrt(var + EPS) * g + b

    x = x + params["emb"][hist][None]
    (wq, bq, wk, bk, wv, bv, wo, bo,
     w1, b1, w2, b2, g1, be1, g2, be2) = params["attn"]
    for _ in range(LAYERS):
        Bn, Tn, Dn = x.shape
        q = x @ wq + bq
        k = x @ wk + bk
        v = x @ wv + bv
        qh = q.reshape(Bn, Tn, H, HEAD_DIM).transpose(0, 2, 1, 3)
        kh = k.reshape(Bn, Tn, H, HEAD_DIM).transpose(0, 2, 1, 3)
        vh = v.reshape(Bn, Tn, H, HEAD_DIM).transpose(0, 2, 1, 3)
        s = jnp.einsum("bhtd,bhsd->bhts", qh, kh) / (HEAD_DIM ** 0.5)
        p = jax.nn.softmax(s, axis=-1)
        o = jnp.einsum("bhts,bhsd->bhtd", p, vh).transpose(0, 2, 1, 3).reshape(Bn, Tn, Dn)
        o = o @ wo + bo
        x1 = ln(x + o, g1, be1)
        f = jnp.maximum(x1 @ w1 + b1, 0.0) @ w2 + b2
        x = ln(x1 + f, g2, be2)
    out = x[:, -1, :] @ params["pred_w"] + params["pred_b"]
    return out[:, None, :]


# ---------------------------- parameter init ------------------------------------
def init_params(key):
    ks = jax.random.split(key, 12)
    s = 0.1
    attn = (
        jax.random.normal(ks[0], (D, D), jnp.float32) * s,   # Wq (stored as in,out)
        jax.random.normal(ks[1], (1, D), jnp.float32) * s,   # bq
        jax.random.normal(ks[2], (D, D), jnp.float32) * s,   # Wk
        jax.random.normal(ks[3], (1, D), jnp.float32) * s,   # bk
        jax.random.normal(ks[4], (D, D), jnp.float32) * s,   # Wv
        jax.random.normal(ks[5], (1, D), jnp.float32) * s,   # bv
        jax.random.normal(ks[6], (D, D), jnp.float32) * s,   # Wo
        jax.random.normal(ks[7], (1, D), jnp.float32) * s,   # bo
        jax.random.normal(ks[8], (D, FF), jnp.float32) * s,  # W1
        jnp.zeros((1, FF), jnp.float32),                     # b1
        jax.random.normal(ks[9], (FF, D), jnp.float32) * s,  # W2
        jnp.zeros((1, D), jnp.float32),                      # b2
        jnp.ones((1, D), jnp.float32),                       # ln1 gamma
        jnp.zeros((1, D), jnp.float32),                      # ln1 beta
        jnp.ones((1, D), jnp.float32),                       # ln2 gamma
        jnp.zeros((1, D), jnp.float32),                      # ln2 beta
    )
    return {
        "emb": jax.random.normal(ks[10], (VOCAB_TIME, D), jnp.float32) * s,
        "attn": attn,
        "pred_w": jax.random.normal(ks[11], (D, D), jnp.float32) * s,
        "pred_b": jnp.zeros((1, D), jnp.float32),
    }


if __name__ == "__main__":
    key = jax.random.PRNGKey(0)
    k_x, k_t, k_p = jax.random.split(key, 3)
    params = init_params(k_p)
    kparams = pack_params(params)                     # one-time weight packing
    x = jax.random.normal(k_x, (B, T, D), jnp.float32)
    hist = jax.random.randint(k_t, (T,), 0, VOCAB_TIME)   # int32

    fwd = jax.jit(sequence_forward)
    out = jax.block_until_ready(fwd(x, hist, kparams))
    assert out.shape == (B, 1, D), out.shape

    ref = ref_forward(x, hist, params)
    assert jnp.allclose(out, ref, rtol=2e-2, atol=2e-2), float(jnp.abs(out - ref).max())

    print("KERNEL_OK")
</pallas_src>

<mosaic_0001>
module attributes {stable_mosaic.version = 11 : i64} {
  func.func @fused_seq_kernel(%arg0: i32, %arg1: memref<16x32xf32, #tpu.memory_space<vmem>>, %arg2: memref<8x1xi32, #tpu.memory_space<vmem>>, %arg3: memref<48x32xf32, #tpu.memory_space<vmem>>, %arg4: memref<32x96xf32, #tpu.memory_space<vmem>>, %arg5: memref<1x96xf32, #tpu.memory_space<vmem>>, %arg6: memref<32x32xf32, #tpu.memory_space<vmem>>, %arg7: memref<1x32xf32, #tpu.memory_space<vmem>>, %arg8: memref<32x128xf32, #tpu.memory_space<vmem>>, %arg9: memref<1x128xf32, #tpu.memory_space<vmem>>, %arg10: memref<128x32xf32, #tpu.memory_space<vmem>>, %arg11: memref<1x32xf32, #tpu.memory_space<vmem>>, %arg12: memref<1x32xf32, #tpu.memory_space<vmem>>, %arg13: memref<1x32xf32, #tpu.memory_space<vmem>>, %arg14: memref<1x32xf32, #tpu.memory_space<vmem>>, %arg15: memref<1x32xf32, #tpu.memory_space<vmem>>, %arg16: memref<32x32xf32, #tpu.memory_space<vmem>>, %arg17: memref<1x32xf32, #tpu.memory_space<vmem>>, %arg18: memref<16x32xf32, #tpu.memory_space<vmem>>) attributes {dimension_semantics = [#tpu.dimension_semantics<arbitrary>], iteration_bounds = array<i64: 1>, scalar_prefetch = 0 : i64, scratch_operands = 0 : i64, tpu.core_type = #tpu.core_type<tc>, window_params = [{pipeline_mode = #tpu.pipeline_mode<synchronous>, transform_indices = @transform_0, window_bounds = array<i64: 16, 32>}, {pipeline_mode = #tpu.pipeline_mode<synchronous>, transform_indices = @transform_1, window_bounds = array<i64: 8, 1>}, {pipeline_mode = #tpu.pipeline_mode<synchronous>, transform_indices = @transform_2, window_bounds = array<i64: 48, 32>}, {pipeline_mode = #tpu.pipeline_mode<synchronous>, transform_indices = @transform_3, window_bounds = array<i64: 32, 96>}, {pipeline_mode = #tpu.pipeline_mode<synchronous>, transform_indices = @transform_4, window_bounds = array<i64: 1, 96>}, {pipeline_mode = #tpu.pipeline_mode<synchronous>, transform_indices = @transform_5, window_bounds = array<i64: 32, 32>}, {pipeline_mode = #tpu.pipeline_mode<synchronous>, transform_indices = @transform_6, window_bounds = array<i64: 1, 32>}, {pipeline_mode = #tpu.pipeline_mode<synchronous>, transform_indices = @transform_7, window_bounds = array<i64: 32, 128>}, {pipeline_mode = #tpu.pipeline_mode<synchronous>, transform_indices = @transform_8, window_bounds = array<i64: 1, 128>}, {pipeline_mode = #tpu.pipeline_mode<synchronous>, transform_indices = @transform_9, window_bounds = array<i64: 128, 32>}, {pipeline_mode = #tpu.pipeline_mode<synchronous>, transform_indices = @transform_10, window_bounds = array<i64: 1, 32>}, {pipeline_mode = #tpu.pipeline_mode<synchronous>, transform_indices = @transform_11, window_bounds = array<i64: 1, 32>}, {pipeline_mode = #tpu.pipeline_mode<synchronous>, transform_indices = @transform_12, window_bounds = array<i64: 1, 32>}, {pipeline_mode = #tpu.pipeline_mode<synchronous>, transform_indices = @transform_13, window_bounds = array<i64: 1, 32>}, {pipeline_mode = #tpu.pipeline_mode<synchronous>, transform_indices = @transform_14, window_bounds = array<i64: 1, 32>}, {pipeline_mode = #tpu.pipeline_mode<synchronous>, transform_indices = @transform_15, window_bounds = array<i64: 32, 32>}, {pipeline_mode = #tpu.pipeline_mode<synchronous>, transform_indices = @transform_16, window_bounds = array<i64: 1, 32>}, {pipeline_mode = #tpu.pipeline_mode<synchronous>, transform_indices = @transform_17, window_bounds = array<i64: 16, 32>}]} {
    %c0 = arith.constant 0 : index
    %c0_0 = arith.constant 0 : index
    %0 = vector.load %arg2[%c0, %c0_0] : memref<8x1xi32, #tpu.memory_space<vmem>>, vector<8x1xi32>
    %1 = tpu.iota {dimensions = array<i32: 1>} : vector<8x48xi32>
    %2 = vector.broadcast %0 : vector<8x1xi32> to vector<8x48xi32>
    %3 = arith.cmpi eq, %1, %2 : vector<8x48xi32>
    %4 = arith.extui %3 : vector<8x48xi1> to vector<8x48xi32>
    %5 = arith.sitofp %4 : vector<8x48xi32> to vector<8x48xf32>
    %c0_1 = arith.constant 0 : index
    %c0_2 = arith.constant 0 : index
    %6 = vector.load %arg3[%c0_1, %c0_2] : memref<48x32xf32, #tpu.memory_space<vmem>>, vector<48x32xf32>
    %cst = arith.constant dense<0.000000e+00> : vector<8x32xf32>
    %7 = tpu.matmul %5, %6, %cst {dimension_numbers = #tpu.dot_dimension_numbers<[1], [0], [0], [1], [0, 0, 1, 1], [], []>} : vector<8x48xf32>, vector<48x32xf32>, vector<8x32xf32> -> vector<8x32xf32>
    %c0_3 = arith.constant 0 : index
    %c0_4 = arith.constant 0 : index
    %8 = vector.load %arg1[%c0_3, %c0_4] : memref<16x32xf32, #tpu.memory_space<vmem>>, vector<16x32xf32>
    %9 = tpu.concatenate %7, %7 in 0 : vector<8x32xf32>, vector<8x32xf32> -> vector<16x32xf32>
    %10 = arith.addf %8, %9 : vector<16x32xf32>
    %11 = tpu.iota {dimensions = array<i32: 0>} : vector<64x32xi32>
    %c4_i32 = arith.constant 4 : i32
    %12 = vector.broadcast %c4_i32 : i32 to vector<64x32xi32>
    %13 = arith.shrsi %11, %12 : vector<64x32xi32>
    %14 = tpu.iota {dimensions = array<i32: 1>} : vector<64x32xi32>
    %c3_i32 = arith.constant 3 : i32
    %15 = vector.broadcast %c3_i32 : i32 to vector<64x32xi32>
    %16 = arith.shrsi %14, %15 : vector<64x32xi32>
    %17 = arith.cmpi eq, %13, %16 : vector<64x32xi32>
    %18 = arith.extui %17 : vector<64x32xi1> to vector<64x32xi32>
    %19 = arith.sitofp %18 : vector<64x32xi32> to vector<64x32xf32>
    %20 = tpu.iota {dimensions = array<i32: 0>} : vector<16x64xi32>
    %c3_i32_5 = arith.constant 3 : i32
    %21 = vector.broadcast %c3_i32_5 : i32 to vector<16x64xi32>
    %22 = arith.shrsi %20, %21 : vector<16x64xi32>
    %23 = tpu.iota {dimensions = array<i32: 1>} : vector<16x64xi32>
    %c15_i32 = arith.constant 15 : i32
    %24 = vector.broadcast %c15_i32 : i32 to vector<16x64xi32>
    %25 = arith.andi %23, %24 : vector<16x64xi32>
    %c3_i32_6 = arith.constant 3 : i32
    %26 = vector.broadcast %c3_i32_6 : i32 to vector<16x64xi32>
    %27 = arith.shrsi %25, %26 : vector<16x64xi32>
    %28 = arith.cmpi eq, %22, %27 : vector<16x64xi32>
    %cst_7 = arith.constant 0.000000e+00 : f32
    %cst_8 = arith.constant -1.000000e+30 : f32
    %29 = vector.broadcast %cst_7 : f32 to vector<16x64xf32>
    %30 = vector.broadcast %cst_8 : f32 to vector<16x64xf32>
    %31 = arith.select %28, %29, %30 : vector<16x64xi1>, vector<16x64xf32>
    %c0_9 = arith.constant 0 : index
    %c0_10 = arith.constant 0 : index
    %32 = vector.load %arg4[%c0_9, %c0_10] : memref<32x96xf32, #tpu.memory_space<vmem>>, vector<32x96xf32>
    %c0_11 = arith.constant 0 : index
    %c0_12 = arith.constant 0 : index
    %33 = vector.load %arg5[%c0_11, %c0_12] : memref<1x96xf32, #tpu.memory_space<vmem>>, vector<1x96xf32>
    %c0_13 = arith.constant 0 : index
    %c0_14 = arith.constant 0 : index
    %34 = vector.load %arg6[%c0_13, %c0_14] : memref<32x32xf32, #tpu.memory_space<vmem>>, vector<32x32xf32>
    %c0_15 = arith.constant 0 : index
    %c0_16 = arith.constant 0 : index
    %35 = vector.load %arg7[%c0_15, %c0_16] : memref<1x32xf32, #tpu.memory_space<vmem>>, vector<1x32xf32>
    %c0_17 = arith.constant 0 : index
    %c0_18 = arith.constant 0 : index
    %36 = vector.load %arg8[%c0_17, %c0_18] : memref<32x128xf32, #tpu.memory_space<vmem>>, vector<32x128xf32>
    %c0_19 = arith.constant 0 : index
    %c0_20 = arith.constant 0 : index
    %37 = vector.load %arg9[%c0_19, %c0_20] : memref<1x128xf32, #tpu.memory_space<vmem>>, vector<1x128xf32>
    %c0_21 = arith.constant 0 : index
    %c0_22 = arith.constant 0 : index
    %38 = vector.load %arg10[%c0_21, %c0_22] : memref<128x32xf32, #tpu.memory_space<vmem>>, vector<128x32xf32>
    %c0_23 = arith.constant 0 : index
    %c0_24 = arith.constant 0 : index
    %39 = vector.load %arg11[%c0_23, %c0_24] : memref<1x32xf32, #tpu.memory_space<vmem>>, vector<1x32xf32>
    %c0_25 = arith.constant 0 : index
    %c0_26 = arith.constant 0 : index
    %40 = vector.load %arg12[%c0_25, %c0_26] : memref<1x32xf32, #tpu.memory_space<vmem>>, vector<1x32xf32>
    %c0_27 = arith.constant 0 : index
    %c0_28 = arith.constant 0 : index
    %41 = vector.load %arg13[%c0_27, %c0_28] : memref<1x32xf32, #tpu.memory_space<vmem>>, vector<1x32xf32>
    %c0_29 = arith.constant 0 : index
    %c0_30 = arith.constant 0 : index
    %42 = vector.load %arg14[%c0_29, %c0_30] : memref<1x32xf32, #tpu.memory_space<vmem>>, vector<1x32xf32>
    %c0_31 = arith.constant 0 : index
    %c0_32 = arith.constant 0 : index
    %43 = vector.load %arg15[%c0_31, %c0_32] : memref<1x32xf32, #tpu.memory_space<vmem>>, vector<1x32xf32>
    %cst_33 = arith.constant dense<0.000000e+00> : vector<16x96xf32>
    %44 = tpu.matmul %10, %32, %cst_33 {dimension_numbers = #tpu.dot_dimension_numbers<[1], [0], [0], [1], [0, 0, 1, 1], [], []>} : vector<16x32xf32>, vector<32x96xf32>, vector<16x96xf32> -> vector<16x96xf32>
    %45 = vector.broadcast %33 : vector<1x96xf32> to vector<16x96xf32>
    %46 = arith.addf %44, %45 : vector<16x96xf32>
    %47 = vector.extract_strided_slice %46 {offsets = [0, 0], sizes = [16, 32], strides = [1, 1]} : vector<16x96xf32> to vector<16x32xf32>
    %48 = vector.extract_strided_slice %46 {offsets = [0, 32], sizes = [16, 32], strides = [1, 1]} : vector<16x96xf32> to vector<16x32xf32>
    %49 = vector.extract_strided_slice %46 {offsets = [0, 64], sizes = [16, 32], strides = [1, 1]} : vector<16x96xf32> to vector<16x32xf32>
    %50 = tpu.concatenate %48, %48, %48, %48 in 0 : vector<16x32xf32>, vector<16x32xf32>, vector<16x32xf32>, vector<16x32xf32> -> vector<64x32xf32>
    %51 = arith.mulf %50, %19 : vector<64x32xf32>
    %52 = tpu.concatenate %49, %49, %49, %49 in 0 : vector<16x32xf32>, vector<16x32xf32>, vector<16x32xf32>, vector<16x32xf32> -> vector<64x32xf32>
    %53 = arith.mulf %52, %19 : vector<64x32xf32>
    %cst_34 = arith.constant dense<0.000000e+00> : vector<16x64xf32>
    %54 = tpu.matmul %47, %51, %cst_34 {dimension_numbers = #tpu.dot_dimension_numbers<[1], [1], [0], [0], [0, 0, 1, 0], [], []>} : vector<16x32xf32>, vector<64x32xf32>, vector<16x64xf32> -> vector<16x64xf32>
    %55 = arith.addf %54, %31 : vector<16x64xf32>
    %cst_35 = arith.constant dense<0xFF800000> : vector<16xf32>
    %56 = vector.multi_reduction <maximumf>, %55, %cst_35 [1] : vector<16x64xf32> to vector<16xf32>
    %57 = vector.shape_cast %56 : vector<16xf32> to vector<16x1xf32>
    %58 = vector.broadcast %57 : vector<16x1xf32> to vector<16x64xf32>
    %59 = arith.subf %55, %58 : vector<16x64xf32>
    %60 = math.exp %59 : vector<16x64xf32>
    %cst_36 = arith.constant dense<0.000000e+00> : vector<16x32xf32>
    %61 = tpu.matmul %60, %19, %cst_36 {dimension_numbers = #tpu.dot_dimension_numbers<[1], [0], [0], [1], [0, 0, 1, 1], [], []>} : vector<16x64xf32>, vector<64x32xf32>, vector<16x32xf32> -> vector<16x32xf32>
    %cst_37 = arith.constant dense<0.000000e+00> : vector<16x32xf32>
    %62 = tpu.matmul %60, %53, %cst_37 {dimension_numbers = #tpu.dot_dimension_numbers<[1], [0], [0], [1], [0, 0, 1, 1], [], []>} : vector<16x64xf32>, vector<64x32xf32>, vector<16x32xf32> -> vector<16x32xf32>
    %63 = tpu.reciprocal %61 : vector<16x32xf32> -> vector<16x32xf32>
    %64 = arith.mulf %62, %63 : vector<16x32xf32>
    %cst_38 = arith.constant dense<0.000000e+00> : vector<16x32xf32>
    %65 = tpu.matmul %64, %34, %cst_38 {dimension_numbers = #tpu.dot_dimension_numbers<[1], [0], [0], [1], [0, 0, 1, 1], [], []>} : vector<16x32xf32>, vector<32x32xf32>, vector<16x32xf32> -> vector<16x32xf32>
    %66 = vector.broadcast %35 : vector<1x32xf32> to vector<16x32xf32>
    %67 = arith.addf %65, %66 : vector<16x32xf32>
    %68 = arith.addf %10, %67 : vector<16x32xf32>
    %cst_39 = arith.constant dense<0.000000e+00> : vector<16xf32>
    %69 = vector.multi_reduction <add>, %68, %cst_39 [1] : vector<16x32xf32> to vector<16xf32>
    %70 = vector.shape_cast %69 : vector<16xf32> to vector<16x1xf32>
    %cst_40 = arith.constant 3.200000e+01 : f32
    %71 = vector.broadcast %cst_40 : f32 to vector<16x1xf32>
    %72 = arith.divf %70, %71 : vector<16x1xf32>
    %73 = vector.broadcast %72 : vector<16x1xf32> to vector<16x32xf32>
    %74 = arith.subf %68, %73 : vector<16x32xf32>
    %75 = arith.mulf %74, %74 : vector<16x32xf32>
    %cst_41 = arith.constant dense<0.000000e+00> : vector<16xf32>
    %76 = vector.multi_reduction <add>, %75, %cst_41 [1] : vector<16x32xf32> to vector<16xf32>
    %77 = vector.shape_cast %76 : vector<16xf32> to vector<16x1xf32>
    %cst_42 = arith.constant 3.200000e+01 : f32
    %78 = vector.broadcast %cst_42 : f32 to vector<16x1xf32>
    %79 = arith.divf %77, %78 : vector<16x1xf32>
    %80 = vector.broadcast %72 : vector<16x1xf32> to vector<16x32xf32>
    %81 = arith.subf %68, %80 : vector<16x32xf32>
    %cst_43 = arith.constant 9.99999974E-6 : f32
    %82 = vector.broadcast %cst_43 : f32 to vector<16x1xf32>
    %83 = arith.addf %79, %82 : vector<16x1xf32>
    %84 = math.rsqrt %83 : vector<16x1xf32>
    %85 = vector.broadcast %84 : vector<16x1xf32> to vector<16x32xf32>
    %86 = arith.mulf %81, %85 : vector<16x32xf32>
    %87 = vector.broadcast %40 : vector<1x32xf32> to vector<16x32xf32>
    %88 = arith.mulf %86, %87 : vector<16x32xf32>
    %89 = vector.broadcast %41 : vector<1x32xf32> to vector<16x32xf32>
    %90 = arith.addf %88, %89 : vector<16x32xf32>
    %cst_44 = arith.constant dense<0.000000e+00> : vector<16x128xf32>
    %91 = tpu.matmul %90, %36, %cst_44 {dimension_numbers = #tpu.dot_dimension_numbers<[1], [0], [0], [1], [0, 0, 1, 1], [], []>} : vector<16x32xf32>, vector<32x128xf32>, vector<16x128xf32> -> vector<16x128xf32>
    %92 = vector.broadcast %37 : vector<1x128xf32> to vector<16x128xf32>
    %93 = arith.addf %91, %92 : vector<16x128xf32>
    %cst_45 = arith.constant 0.000000e+00 : f32
    %94 = vector.broadcast %cst_45 : f32 to vector<16x128xf32>
    %95 = arith.maximumf %93, %94 : vector<16x128xf32>
    %cst_46 = arith.constant dense<0.000000e+00> : vector<16x32xf32>
    %96 = tpu.matmul %95, %38, %cst_46 {dimension_numbers = #tpu.dot_dimension_numbers<[1], [0], [0], [1], [0, 0, 1, 1], [], []>} : vector<16x128xf32>, vector<128x32xf32>, vector<16x32xf32> -> vector<16x32xf32>
    %97 = vector.broadcast %39 : vector<1x32xf32> to vector<16x32xf32>
    %98 = arith.addf %96, %97 : vector<16x32xf32>
    %99 = arith.addf %90, %98 : vector<16x32xf32>
    %cst_47 = arith.constant dense<0.000000e+00> : vector<16xf32>
    %100 = vector.multi_reduction <add>, %99, %cst_47 [1] : vector<16x32xf32> to vector<16xf32>
    %101 = vector.shape_cast %100 : vector<16xf32> to vector<16x1xf32>
    %cst_48 = arith.constant 3.200000e+01 : f32
    %102 = vector.broadcast %cst_48 : f32 to vector<16x1xf32>
    %103 = arith.divf %101, %102 : vector<16x1xf32>
    %104 = vector.broadcast %103 : vector<16x1xf32> to vector<16x32xf32>
    %105 = arith.subf %99, %104 : vector<16x32xf32>
    %106 = arith.mulf %105, %105 : vector<16x32xf32>
    %cst_49 = arith.constant dense<0.000000e+00> : vector<16xf32>
    %107 = vector.multi_reduction <add>, %106, %cst_49 [1] : vector<16x32xf32> to vector<16xf32>
    %108 = vector.shape_cast %107 : vector<16xf32> to vector<16x1xf32>
    %cst_50 = arith.constant 3.200000e+01 : f32
    %109 = vector.broadcast %cst_50 : f32 to vector<16x1xf32>
    %110 = arith.divf %108, %109 : vector<16x1xf32>
    %111 = vector.broadcast %103 : vector<16x1xf32> to vector<16x32xf32>
    %112 = arith.subf %99, %111 : vector<16x32xf32>
    %cst_51 = arith.constant 9.99999974E-6 : f32
    %113 = vector.broadcast %cst_51 : f32 to vector<16x1xf32>
    %114 = arith.addf %110, %113 : vector<16x1xf32>
    %115 = math.rsqrt %114 : vector<16x1xf32>
    %116 = vector.broadcast %115 : vector<16x1xf32> to vector<16x32xf32>
    %117 = arith.mulf %112, %116 : vector<16x32xf32>
    %118 = vector.broadcast %42 : vector<1x32xf32> to vector<16x32xf32>
    %119 = arith.mulf %117, %118 : vector<16x32xf32>
    %120 = vector.broadcast %43 : vector<1x32xf32> to vector<16x32xf32>
    %121 = arith.addf %119, %120 : vector<16x32xf32>
    %cst_52 = arith.constant dense<0.000000e+00> : vector<16x96xf32>
    %122 = tpu.matmul %121, %32, %cst_52 {dimension_numbers = #tpu.dot_dimension_numbers<[1], [0], [0], [1], [0, 0, 1, 1], [], []>} : vector<16x32xf32>, vector<32x96xf32>, vector<16x96xf32> -> vector<16x96xf32>
    %123 = vector.broadcast %33 : vector<1x96xf32> to vector<16x96xf32>
    %124 = arith.addf %122, %123 : vector<16x96xf32>
    %125 = vector.extract_strided_slice %124 {offsets = [0, 0], sizes = [16, 32], strides = [1, 1]} : vector<16x96xf32> to vector<16x32xf32>
    %126 = vector.extract_strided_slice %124 {offsets = [0, 32], sizes = [16, 32], strides = [1, 1]} : vector<16x96xf32> to vector<16x32xf32>
    %127 = vector.extract_strided_slice %124 {offsets = [0, 64], sizes = [16, 32], strides = [1, 1]} : vector<16x96xf32> to vector<16x32xf32>
    %128 = tpu.concatenate %126, %126, %126, %126 in 0 : vector<16x32xf32>, vector<16x32xf32>, vector<16x32xf32>, vector<16x32xf32> -> vector<64x32xf32>
    %129 = arith.mulf %128, %19 : vector<64x32xf32>
    %130 = tpu.concatenate %127, %127, %127, %127 in 0 : vector<16x32xf32>, vector<16x32xf32>, vector<16x32xf32>, vector<16x32xf32> -> vector<64x32xf32>
    %131 = arith.mulf %130, %19 : vector<64x32xf32>
    %cst_53 = arith.constant dense<0.000000e+00> : vector<16x64xf32>
    %132 = tpu.matmul %125, %129, %cst_53 {dimension_numbers = #tpu.dot_dimension_numbers<[1], [1], [0], [0], [0, 0, 1, 0], [], []>} : vector<16x32xf32>, vector<64x32xf32>, vector<16x64xf32> -> vector<16x64xf32>
    %133 = arith.addf %132, %31 : vector<16x64xf32>
    %cst_54 = arith.constant dense<0xFF800000> : vector<16xf32>
    %134 = vector.multi_reduction <maximumf>, %133, %cst_54 [1] : vector<16x64xf32> to vector<16xf32>
    %135 = vector.shape_cast %134 : vector<16xf32> to vector<16x1xf32>
    %136 = vector.broadcast %135 : vector<16x1xf32> to vector<16x64xf32>
    %137 = arith.subf %133, %136 : vector<16x64xf32>
    %138 = math.exp %137 : vector<16x64xf32>
    %cst_55 = arith.constant dense<0.000000e+00> : vector<16x32xf32>
    %139 = tpu.matmul %138, %19, %cst_55 {dimension_numbers = #tpu.dot_dimension_numbers<[1], [0], [0], [1], [0, 0, 1, 1], [], []>} : vector<16x64xf32>, vector<64x32xf32>, vector<16x32xf32> -> vector<16x32xf32>
    %cst_56 = arith.constant dense<0.000000e+00> : vector<16x32xf32>
    %140 = tpu.matmul %138, %131, %cst_56 {dimension_numbers = #tpu.dot_dimension_numbers<[1], [0], [0], [1], [0, 0, 1, 1], [], []>} : vector<16x64xf32>, vector<64x32xf32>, vector<16x32xf32> -> vector<16x32xf32>
    %141 = tpu.reciprocal %139 : vector<16x32xf32> -> vector<16x32xf32>
    %142 = arith.mulf %140, %141 : vector<16x32xf32>
    %cst_57 = arith.constant dense<0.000000e+00> : vector<16x32xf32>
    %143 = tpu.matmul %142, %34, %cst_57 {dimension_numbers = #tpu.dot_dimension_numbers<[1], [0], [0], [1], [0, 0, 1, 1], [], []>} : vector<16x32xf32>, vector<32x32xf32>, vector<16x32xf32> -> vector<16x32xf32>
    %144 = vector.broadcast %35 : vector<1x32xf32> to vector<16x32xf32>
    %145 = arith.addf %143, %144 : vector<16x32xf32>
    %146 = arith.addf %121, %145 : vector<16x32xf32>
    %cst_58 = arith.constant dense<0.000000e+00> : vector<16xf32>
    %147 = vector.multi_reduction <add>, %146, %cst_58 [1] : vector<16x32xf32> to vector<16xf32>
    %148 = vector.shape_cast %147 : vector<16xf32> to vector<16x1xf32>
    %cst_59 = arith.constant 3.200000e+01 : f32
    %149 = vector.broadcast %cst_59 : f32 to vector<16x1xf32>
    %150 = arith.divf %148, %149 : vector<16x1xf32>
    %151 = vector.broadcast %150 : vector<16x1xf32> to vector<16x32xf32>
    %152 = arith.subf %146, %151 : vector<16x32xf32>
    %153 = arith.mulf %152, %152 : vector<16x32xf32>
    %cst_60 = arith.constant dense<0.000000e+00> : vector<16xf32>
    %154 = vector.multi_reduction <add>, %153, %cst_60 [1] : vector<16x32xf32> to vector<16xf32>
    %155 = vector.shape_cast %154 : vector<16xf32> to vector<16x1xf32>
    %cst_61 = arith.constant 3.200000e+01 : f32
    %156 = vector.broadcast %cst_61 : f32 to vector<16x1xf32>
    %157 = arith.divf %155, %156 : vector<16x1xf32>
    %158 = vector.broadcast %150 : vector<16x1xf32> to vector<16x32xf32>
    %159 = arith.subf %146, %158 : vector<16x32xf32>
    %cst_62 = arith.constant 9.99999974E-6 : f32
    %160 = vector.broadcast %cst_62 : f32 to vector<16x1xf32>
    %161 = arith.addf %157, %160 : vector<16x1xf32>
    %162 = math.rsqrt %161 : vector<16x1xf32>
    %163 = vector.broadcast %162 : vector<16x1xf32> to vector<16x32xf32>
    %164 = arith.mulf %159, %163 : vector<16x32xf32>
    %165 = vector.broadcast %40 : vector<1x32xf32> to vector<16x32xf32>
    %166 = arith.mulf %164, %165 : vector<16x32xf32>
    %167 = vector.broadcast %41 : vector<1x32xf32> to vector<16x32xf32>
    %168 = arith.addf %166, %167 : vector<16x32xf32>
    %cst_63 = arith.constant dense<0.000000e+00> : vector<16x128xf32>
    %169 = tpu.matmul %168, %36, %cst_63 {dimension_numbers = #tpu.dot_dimension_numbers<[1], [0], [0], [1], [0, 0, 1, 1], [], []>} : vector<16x32xf32>, vector<32x128xf32>, vector<16x128xf32> -> vector<16x128xf32>
    %170 = vector.broadcast %37 : vector<1x128xf32> to vector<16x128xf32>
    %171 = arith.addf %169, %170 : vector<16x128xf32>
    %cst_64 = arith.constant 0.000000e+00 : f32
    %172 = vector.broadcast %cst_64 : f32 to vector<16x128xf32>
    %173 = arith.maximumf %171, %172 : vector<16x128xf32>
    %cst_65 = arith.constant dense<0.000000e+00> : vector<16x32xf32>
    %174 = tpu.matmul %173, %38, %cst_65 {dimension_numbers = #tpu.dot_dimension_numbers<[1], [0], [0], [1], [0, 0, 1, 1], [], []>} : vector<16x128xf32>, vector<128x32xf32>, vector<16x32xf32> -> vector<16x32xf32>
    %175 = vector.broadcast %39 : vector<1x32xf32> to vector<16x32xf32>
    %176 = arith.addf %174, %175 : vector<16x32xf32>
    %177 = arith.addf %168, %176 : vector<16x32xf32>
    %cst_66 = arith.constant dense<0.000000e+00> : vector<16xf32>
    %178 = vector.multi_reduction <add>, %177, %cst_66 [1] : vector<16x32xf32> to vector<16xf32>
    %179 = vector.shape_cast %178 : vector<16xf32> to vector<16x1xf32>
    %cst_67 = arith.constant 3.200000e+01 : f32
    %180 = vector.broadcast %cst_67 : f32 to vector<16x1xf32>
    %181 = arith.divf %179, %180 : vector<16x1xf32>
    %182 = vector.broadcast %181 : vector<16x1xf32> to vector<16x32xf32>
    %183 = arith.subf %177, %182 : vector<16x32xf32>
    %184 = arith.mulf %183, %183 : vector<16x32xf32>
    %cst_68 = arith.constant dense<0.000000e+00> : vector<16xf32>
    %185 = vector.multi_reduction <add>, %184, %cst_68 [1] : vector<16x32xf32> to vector<16xf32>
    %186 = vector.shape_cast %185 : vector<16xf32> to vector<16x1xf32>
    %cst_69 = arith.constant 3.200000e+01 : f32
    %187 = vector.broadcast %cst_69 : f32 to vector<16x1xf32>
    %188 = arith.divf %186, %187 : vector<16x1xf32>
    %189 = vector.broadcast %181 : vector<16x1xf32> to vector<16x32xf32>
    %190 = arith.subf %177, %189 : vector<16x32xf32>
    %cst_70 = arith.constant 9.99999974E-6 : f32
    %191 = vector.broadcast %cst_70 : f32 to vector<16x1xf32>
    %192 = arith.addf %188, %191 : vector<16x1xf32>
    %193 = math.rsqrt %192 : vector<16x1xf32>
    %194 = vector.broadcast %193 : vector<16x1xf32> to vector<16x32xf32>
    %195 = arith.mulf %190, %194 : vector<16x32xf32>
    %196 = vector.broadcast %42 : vector<1x32xf32> to vector<16x32xf32>
    %197 = arith.mulf %195, %196 : vector<16x32xf32>
    %198 = vector.broadcast %43 : vector<1x32xf32> to vector<16x32xf32>
    %199 = arith.addf %197, %198 : vector<16x32xf32>
    %cst_71 = arith.constant dense<0.000000e+00> : vector<16x96xf32>
    %200 = tpu.matmul %199, %32, %cst_71 {dimension_numbers = #tpu.dot_dimension_numbers<[1], [0], [0], [1], [0, 0, 1, 1], [], []>} : vector<16x32xf32>, vector<32x96xf32>, vector<16x96xf32> -> vector<16x96xf32>
    %201 = vector.broadcast %33 : vector<1x96xf32> to vector<16x96xf32>
    %202 = arith.addf %200, %201 : vector<16x96xf32>
    %203 = vector.extract_strided_slice %202 {offsets = [0, 0], sizes = [16, 32], strides = [1, 1]} : vector<16x96xf32> to vector<16x32xf32>
    %204 = vector.extract_strided_slice %202 {offsets = [0, 32], sizes = [16, 32], strides = [1, 1]} : vector<16x96xf32> to vector<16x32xf32>
    %205 = vector.extract_strided_slice %202 {offsets = [0, 64], sizes = [16, 32], strides = [1, 1]} : vector<16x96xf32> to vector<16x32xf32>
    %206 = tpu.concatenate %204, %204, %204, %204 in 0 : vector<16x32xf32>, vector<16x32xf32>, vector<16x32xf32>, vector<16x32xf32> -> vector<64x32xf32>
    %207 = arith.mulf %206, %19 : vector<64x32xf32>
    %208 = tpu.concatenate %205, %205, %205, %205 in 0 : vector<16x32xf32>, vector<16x32xf32>, vector<16x32xf32>, vector<16x32xf32> -> vector<64x32xf32>
    %209 = arith.mulf %208, %19 : vector<64x32xf32>
    %cst_72 = arith.constant dense<0.000000e+00> : vector<16x64xf32>
    %210 = tpu.matmul %203, %207, %cst_72 {dimension_numbers = #tpu.dot_dimension_numbers<[1], [1], [0], [0], [0, 0, 1, 0], [], []>} : vector<16x32xf32>, vector<64x32xf32>, vector<16x64xf32> -> vector<16x64xf32>
    %211 = arith.addf %210, %31 : vector<16x64xf32>
    %cst_73 = arith.constant dense<0xFF800000> : vector<16xf32>
    %212 = vector.multi_reduction <maximumf>, %211, %cst_73 [1] : vector<16x64xf32> to vector<16xf32>
    %213 = vector.shape_cast %212 : vector<16xf32> to vector<16x1xf32>
    %214 = vector.broadcast %213 : vector<16x1xf32> to vector<16x64xf32>
    %215 = arith.subf %211, %214 : vector<16x64xf32>
    %216 = math.exp %215 : vector<16x64xf32>
    %cst_74 = arith.constant dense<0.000000e+00> : vector<16x32xf32>
    %217 = tpu.matmul %216, %19, %cst_74 {dimension_numbers = #tpu.dot_dimension_numbers<[1], [0], [0], [1], [0, 0, 1, 1], [], []>} : vector<16x64xf32>, vector<64x32xf32>, vector<16x32xf32> -> vector<16x32xf32>
    %cst_75 = arith.constant dense<0.000000e+00> : vector<16x32xf32>
    %218 = tpu.matmul %216, %209, %cst_75 {dimension_numbers = #tpu.dot_dimension_numbers<[1], [0], [0], [1], [0, 0, 1, 1], [], []>} : vector<16x64xf32>, vector<64x32xf32>, vector<16x32xf32> -> vector<16x32xf32>
    %219 = tpu.reciprocal %217 : vector<16x32xf32> -> vector<16x32xf32>
    %220 = arith.mulf %218, %219 : vector<16x32xf32>
    %cst_76 = arith.constant dense<0.000000e+00> : vector<16x32xf32>
    %221 = tpu.matmul %220, %34, %cst_76 {dimension_numbers = #tpu.dot_dimension_numbers<[1], [0], [0], [1], [0, 0, 1, 1], [], []>} : vector<16x32xf32>, vector<32x32xf32>, vector<16x32xf32> -> vector<16x32xf32>
    %222 = vector.broadcast %35 : vector<1x32xf32> to vector<16x32xf32>
    %223 = arith.addf %221, %222 : vector<16x32xf32>
    %224 = arith.addf %199, %223 : vector<16x32xf32>
    %cst_77 = arith.constant dense<0.000000e+00> : vector<16xf32>
    %225 = vector.multi_reduction <add>, %224, %cst_77 [1] : vector<16x32xf32> to vector<16xf32>
    %226 = vector.shape_cast %225 : vector<16xf32> to vector<16x1xf32>
    %cst_78 = arith.constant 3.200000e+01 : f32
    %227 = vector.broadcast %cst_78 : f32 to vector<16x1xf32>
    %228 = arith.divf %226, %227 : vector<16x1xf32>
    %229 = vector.broadcast %228 : vector<16x1xf32> to vector<16x32xf32>
    %230 = arith.subf %224, %229 : vector<16x32xf32>
    %231 = arith.mulf %230, %230 : vector<16x32xf32>
    %cst_79 = arith.constant dense<0.000000e+00> : vector<16xf32>
    %232 = vector.multi_reduction <add>, %231, %cst_79 [1] : vector<16x32xf32> to vector<16xf32>
    %233 = vector.shape_cast %232 : vector<16xf32> to vector<16x1xf32>
    %cst_80 = arith.constant 3.200000e+01 : f32
    %234 = vector.broadcast %cst_80 : f32 to vector<16x1xf32>
    %235 = arith.divf %233, %234 : vector<16x1xf32>
    %236 = vector.broadcast %228 : vector<16x1xf32> to vector<16x32xf32>
    %237 = arith.subf %224, %236 : vector<16x32xf32>
    %cst_81 = arith.constant 9.99999974E-6 : f32
    %238 = vector.broadcast %cst_81 : f32 to vector<16x1xf32>
    %239 = arith.addf %235, %238 : vector<16x1xf32>
    %240 = math.rsqrt %239 : vector<16x1xf32>
    %241 = vector.broadcast %240 : vector<16x1xf32> to vector<16x32xf32>
    %242 = arith.mulf %237, %241 : vector<16x32xf32>
    %243 = vector.broadcast %40 : vector<1x32xf32> to vector<16x32xf32>
    %244 = arith.mulf %242, %243 : vector<16x32xf32>
    %245 = vector.broadcast %41 : vector<1x32xf32> to vector<16x32xf32>
    %246 = arith.addf %244, %245 : vector<16x32xf32>
    %cst_82 = arith.constant dense<0.000000e+00> : vector<16x128xf32>
    %247 = tpu.matmul %246, %36, %cst_82 {dimension_numbers = #tpu.dot_dimension_numbers<[1], [0], [0], [1], [0, 0, 1, 1], [], []>} : vector<16x32xf32>, vector<32x128xf32>, vector<16x128xf32> -> vector<16x128xf32>
    %248 = vector.broadcast %37 : vector<1x128xf32> to vector<16x128xf32>
    %249 = arith.addf %247, %248 : vector<16x128xf32>
    %cst_83 = arith.constant 0.000000e+00 : f32
    %250 = vector.broadcast %cst_83 : f32 to vector<16x128xf32>
    %251 = arith.maximumf %249, %250 : vector<16x128xf32>
    %cst_84 = arith.constant dense<0.000000e+00> : vector<16x32xf32>
    %252 = tpu.matmul %251, %38, %cst_84 {dimension_numbers = #tpu.dot_dimension_numbers<[1], [0], [0], [1], [0, 0, 1, 1], [], []>} : vector<16x128xf32>, vector<128x32xf32>, vector<16x32xf32> -> vector<16x32xf32>
    %253 = vector.broadcast %39 : vector<1x32xf32> to vector<16x32xf32>
    %254 = arith.addf %252, %253 : vector<16x32xf32>
    %255 = arith.addf %246, %254 : vector<16x32xf32>
    %cst_85 = arith.constant dense<0.000000e+00> : vector<16xf32>
    %256 = vector.multi_reduction <add>, %255, %cst_85 [1] : vector<16x32xf32> to vector<16xf32>
    %257 = vector.shape_cast %256 : vector<16xf32> to vector<16x1xf32>
    %cst_86 = arith.constant 3.200000e+01 : f32
    %258 = vector.broadcast %cst_86 : f32 to vector<16x1xf32>
    %259 = arith.divf %257, %258 : vector<16x1xf32>
    %260 = vector.broadcast %259 : vector<16x1xf32> to vector<16x32xf32>
    %261 = arith.subf %255, %260 : vector<16x32xf32>
    %262 = arith.mulf %261, %261 : vector<16x32xf32>
    %cst_87 = arith.constant dense<0.000000e+00> : vector<16xf32>
    %263 = vector.multi_reduction <add>, %262, %cst_87 [1] : vector<16x32xf32> to vector<16xf32>
    %264 = vector.shape_cast %263 : vector<16xf32> to vector<16x1xf32>
    %cst_88 = arith.constant 3.200000e+01 : f32
    %265 = vector.broadcast %cst_88 : f32 to vector<16x1xf32>
    %266 = arith.divf %264, %265 : vector<16x1xf32>
    %267 = vector.broadcast %259 : vector<16x1xf32> to vector<16x32xf32>
    %268 = arith.subf %255, %267 : vector<16x32xf32>
    %cst_89 = arith.constant 9.99999974E-6 : f32
    %269 = vector.broadcast %cst_89 : f32 to vector<16x1xf32>
    %270 = arith.addf %266, %269 : vector<16x1xf32>
    %271 = math.rsqrt %270 : vector<16x1xf32>
    %272 = vector.broadcast %271 : vector<16x1xf32> to vector<16x32xf32>
    %273 = arith.mulf %268, %272 : vector<16x32xf32>
    %274 = vector.broadcast %42 : vector<1x32xf32> to vector<16x32xf32>
    %275 = arith.mulf %273, %274 : vector<16x32xf32>
    %276 = vector.broadcast %43 : vector<1x32xf32> to vector<16x32xf32>
    %277 = arith.addf %275, %276 : vector<16x32xf32>
    %cst_90 = arith.constant dense<0.000000e+00> : vector<16x96xf32>
    %278 = tpu.matmul %277, %32, %cst_90 {dimension_numbers = #tpu.dot_dimension_numbers<[1], [0], [0], [1], [0, 0, 1, 1], [], []>} : vector<16x32xf32>, vector<32x96xf32>, vector<16x96xf32> -> vector<16x96xf32>
    %279 = vector.broadcast %33 : vector<1x96xf32> to vector<16x96xf32>
    %280 = arith.addf %278, %279 : vector<16x96xf32>
    %281 = vector.extract_strided_slice %280 {offsets = [0, 0], sizes = [16, 32], strides = [1, 1]} : vector<16x96xf32> to vector<16x32xf32>
    %282 = vector.extract_strided_slice %280 {offsets = [0, 32], sizes = [16, 32], strides = [1, 1]} : vector<16x96xf32> to vector<16x32xf32>
    %283 = vector.extract_strided_slice %280 {offsets = [0, 64], sizes = [16, 32], strides = [1, 1]} : vector<16x96xf32> to vector<16x32xf32>
    %284 = tpu.concatenate %282, %282, %282, %282 in 0 : vector<16x32xf32>, vector<16x32xf32>, vector<16x32xf32>, vector<16x32xf32> -> vector<64x32xf32>
    %285 = arith.mulf %284, %19 : vector<64x32xf32>
    %286 = tpu.concatenate %283, %283, %283, %283 in 0 : vector<16x32xf32>, vector<16x32xf32>, vector<16x32xf32>, vector<16x32xf32> -> vector<64x32xf32>
    %287 = arith.mulf %286, %19 : vector<64x32xf32>
    %cst_91 = arith.constant dense<0.000000e+00> : vector<16x64xf32>
    %288 = tpu.matmul %281, %285, %cst_91 {dimension_numbers = #tpu.dot_dimension_numbers<[1], [1], [0], [0], [0, 0, 1, 0], [], []>} : vector<16x32xf32>, vector<64x32xf32>, vector<16x64xf32> -> vector<16x64xf32>
    %289 = arith.addf %288, %31 : vector<16x64xf32>
    %cst_92 = arith.constant dense<0xFF800000> : vector<16xf32>
    %290 = vector.multi_reduction <maximumf>, %289, %cst_92 [1] : vector<16x64xf32> to vector<16xf32>
    %291 = vector.shape_cast %290 : vector<16xf32> to vector<16x1xf32>
    %292 = vector.broadcast %291 : vector<16x1xf32> to vector<16x64xf32>
    %293 = arith.subf %289, %292 : vector<16x64xf32>
    %294 = math.exp %293 : vector<16x64xf32>
    %cst_93 = arith.constant dense<0.000000e+00> : vector<16x32xf32>
    %295 = tpu.matmul %294, %19, %cst_93 {dimension_numbers = #tpu.dot_dimension_numbers<[1], [0], [0], [1], [0, 0, 1, 1], [], []>} : vector<16x64xf32>, vector<64x32xf32>, vector<16x32xf32> -> vector<16x32xf32>
    %cst_94 = arith.constant dense<0.000000e+00> : vector<16x32xf32>
    %296 = tpu.matmul %294, %287, %cst_94 {dimension_numbers = #tpu.dot_dimension_numbers<[1], [0], [0], [1], [0, 0, 1, 1], [], []>} : vector<16x64xf32>, vector<64x32xf32>, vector<16x32xf32> -> vector<16x32xf32>
    %297 = tpu.reciprocal %295 : vector<16x32xf32> -> vector<16x32xf32>
    %298 = arith.mulf %296, %297 : vector<16x32xf32>
    %cst_95 = arith.constant dense<0.000000e+00> : vector<16x32xf32>
    %299 = tpu.matmul %298, %34, %cst_95 {dimension_numbers = #tpu.dot_dimension_numbers<[1], [0], [0], [1], [0, 0, 1, 1], [], []>} : vector<16x32xf32>, vector<32x32xf32>, vector<16x32xf32> -> vector<16x32xf32>
    %300 = vector.broadcast %35 : vector<1x32xf32> to vector<16x32xf32>
    %301 = arith.addf %299, %300 : vector<16x32xf32>
    %302 = arith.addf %277, %301 : vector<16x32xf32>
    %cst_96 = arith.constant dense<0.000000e+00> : vector<16xf32>
    %303 = vector.multi_reduction <add>, %302, %cst_96 [1] : vector<16x32xf32> to vector<16xf32>
    %304 = vector.shape_cast %303 : vector<16xf32> to vector<16x1xf32>
    %cst_97 = arith.constant 3.200000e+01 : f32
    %305 = vector.broadcast %cst_97 : f32 to vector<16x1xf32>
    %306 = arith.divf %304, %305 : vector<16x1xf32>
    %307 = vector.broadcast %306 : vector<16x1xf32> to vector<16x32xf32>
    %308 = arith.subf %302, %307 : vector<16x32xf32>
    %309 = arith.mulf %308, %308 : vector<16x32xf32>
    %cst_98 = arith.constant dense<0.000000e+00> : vector<16xf32>
    %310 = vector.multi_reduction <add>, %309, %cst_98 [1] : vector<16x32xf32> to vector<16xf32>
    %311 = vector.shape_cast %310 : vector<16xf32> to vector<16x1xf32>
    %cst_99 = arith.constant 3.200000e+01 : f32
    %312 = vector.broadcast %cst_99 : f32 to vector<16x1xf32>
    %313 = arith.divf %311, %312 : vector<16x1xf32>
    %314 = vector.broadcast %306 : vector<16x1xf32> to vector<16x32xf32>
    %315 = arith.subf %302, %314 : vector<16x32xf32>
    %cst_100 = arith.constant 9.99999974E-6 : f32
    %316 = vector.broadcast %cst_100 : f32 to vector<16x1xf32>
    %317 = arith.addf %313, %316 : vector<16x1xf32>
    %318 = math.rsqrt %317 : vector<16x1xf32>
    %319 = vector.broadcast %318 : vector<16x1xf32> to vector<16x32xf32>
    %320 = arith.mulf %315, %319 : vector<16x32xf32>
    %321 = vector.broadcast %40 : vector<1x32xf32> to vector<16x32xf32>
    %322 = arith.mulf %320, %321 : vector<16x32xf32>
    %323 = vector.broadcast %41 : vector<1x32xf32> to vector<16x32xf32>
    %324 = arith.addf %322, %323 : vector<16x32xf32>
    %cst_101 = arith.constant dense<0.000000e+00> : vector<16x128xf32>
    %325 = tpu.matmul %324, %36, %cst_101 {dimension_numbers = #tpu.dot_dimension_numbers<[1], [0], [0], [1], [0, 0, 1, 1], [], []>} : vector<16x32xf32>, vector<32x128xf32>, vector<16x128xf32> -> vector<16x128xf32>
    %326 = vector.broadcast %37 : vector<1x128xf32> to vector<16x128xf32>
    %327 = arith.addf %325, %326 : vector<16x128xf32>
    %cst_102 = arith.constant 0.000000e+00 : f32
    %328 = vector.broadcast %cst_102 : f32 to vector<16x128xf32>
    %329 = arith.maximumf %327, %328 : vector<16x128xf32>
    %cst_103 = arith.constant dense<0.000000e+00> : vector<16x32xf32>
    %330 = tpu.matmul %329, %38, %cst_103 {dimension_numbers = #tpu.dot_dimension_numbers<[1], [0], [0], [1], [0, 0, 1, 1], [], []>} : vector<16x128xf32>, vector<128x32xf32>, vector<16x32xf32> -> vector<16x32xf32>
    %331 = vector.broadcast %39 : vector<1x32xf32> to vector<16x32xf32>
    %332 = arith.addf %330, %331 : vector<16x32xf32>
    %333 = arith.addf %324, %332 : vector<16x32xf32>
    %cst_104 = arith.constant dense<0.000000e+00> : vector<16xf32>
    %334 = vector.multi_reduction <add>, %333, %cst_104 [1] : vector<16x32xf32> to vector<16xf32>
    %335 = vector.shape_cast %334 : vector<16xf32> to vector<16x1xf32>
    %cst_105 = arith.constant 3.200000e+01 : f32
    %336 = vector.broadcast %cst_105 : f32 to vector<16x1xf32>
    %337 = arith.divf %335, %336 : vector<16x1xf32>
    %338 = vector.broadcast %337 : vector<16x1xf32> to vector<16x32xf32>
    %339 = arith.subf %333, %338 : vector<16x32xf32>
    %340 = arith.mulf %339, %339 : vector<16x32xf32>
    %cst_106 = arith.constant dense<0.000000e+00> : vector<16xf32>
    %341 = vector.multi_reduction <add>, %340, %cst_106 [1] : vector<16x32xf32> to vector<16xf32>
    %342 = vector.shape_cast %341 : vector<16xf32> to vector<16x1xf32>
    %cst_107 = arith.constant 3.200000e+01 : f32
    %343 = vector.broadcast %cst_107 : f32 to vector<16x1xf32>
    %344 = arith.divf %342, %343 : vector<16x1xf32>
    %345 = vector.broadcast %337 : vector<16x1xf32> to vector<16x32xf32>
    %346 = arith.subf %333, %345 : vector<16x32xf32>
    %cst_108 = arith.constant 9.99999974E-6 : f32
    %347 = vector.broadcast %cst_108 : f32 to vector<16x1xf32>
    %348 = arith.addf %344, %347 : vector<16x1xf32>
    %349 = math.rsqrt %348 : vector<16x1xf32>
    %350 = vector.broadcast %349 : vector<16x1xf32> to vector<16x32xf32>
    %351 = arith.mulf %346, %350 : vector<16x32xf32>
    %352 = vector.broadcast %42 : vector<1x32xf32> to vector<16x32xf32>
    %353 = arith.mulf %351, %352 : vector<16x32xf32>
    %354 = vector.broadcast %43 : vector<1x32xf32> to vector<16x32xf32>
    %355 = arith.addf %353, %354 : vector<16x32xf32>
    %c0_109 = arith.constant 0 : index
    %c0_110 = arith.constant 0 : index
    %356 = vector.load %arg16[%c0_109, %c0_110] : memref<32x32xf32, #tpu.memory_space<vmem>>, vector<32x32xf32>
    %cst_111 = arith.constant dense<0.000000e+00> : vector<16x32xf32>
    %357 = tpu.matmul %355, %356, %cst_111 {dimension_numbers = #tpu.dot_dimension_numbers<[1], [0], [0], [1], [0, 0, 1, 1], [], []>} : vector<16x32xf32>, vector<32x32xf32>, vector<16x32xf32> -> vector<16x32xf32>
    %c0_112 = arith.constant 0 : index
    %c0_113 = arith.constant 0 : index
    %358 = vector.load %arg17[%c0_112, %c0_113] : memref<1x32xf32, #tpu.memory_space<vmem>>, vector<1x32xf32>
    %359 = vector.broadcast %358 : vector<1x32xf32> to vector<16x32xf32>
    %360 = arith.addf %357, %359 : vector<16x32xf32>
    %c0_114 = arith.constant 0 : index
    %c0_115 = arith.constant 0 : index
    %361 = vector.load %arg18[%c0_114, %c0_115] : memref<16x32xf32, #tpu.memory_space<vmem>>, vector<16x32xf32>
    tpu.vector_store %arg18[%c0_114, %c0_115], %360 {strides = array<i32>} : memref<16x32xf32, #tpu.memory_space<vmem>>, vector<16x32xf32>,
    return
  }
  func.func @transform_0(%arg0: i32) -> (i32, i32) {
    %c0_i32 = arith.constant 0 : i32
    %c0_i32_0 = arith.constant 0 : i32
    %c0_i32_1 = arith.constant 0 : i32
    return %c0_i32, %c0_i32_0 : i32, i32
  }
  func.func @transform_1(%arg0: i32) -> (i32, i32) {
    %c0_i32 = arith.constant 0 : i32
    %c0_i32_0 = arith.constant 0 : i32
    %c0_i32_1 = arith.constant 0 : i32
    return %c0_i32, %c0_i32_0 : i32, i32
  }
  func.func @transform_2(%arg0: i32) -> (i32, i32) {
    %c0_i32 = arith.constant 0 : i32
    %c0_i32_0 = arith.constant 0 : i32
    %c0_i32_1 = arith.constant 0 : i32
    return %c0_i32, %c0_i32_0 : i32, i32
  }
  func.func @transform_3(%arg0: i32) -> (i32, i32) {
    %c0_i32 = arith.constant 0 : i32
    %c0_i32_0 = arith.constant 0 : i32
    %c0_i32_1 = arith.constant 0 : i32
    return %c0_i32, %c0_i32_0 : i32, i32
  }
  func.func @transform_4(%arg0: i32) -> (i32, i32) {
    %c0_i32 = arith.constant 0 : i32
    %c0_i32_0 = arith.constant 0 : i32
    %c0_i32_1 = arith.constant 0 : i32
    return %c0_i32, %c0_i32_0 : i32, i32
  }
  func.func @transform_5(%arg0: i32) -> (i32, i32) {
    %c0_i32 = arith.constant 0 : i32
    %c0_i32_0 = arith.constant 0 : i32
    %c0_i32_1 = arith.constant 0 : i32
    return %c0_i32, %c0_i32_0 : i32, i32
  }
  func.func @transform_6(%arg0: i32) -> (i32, i32) {
    %c0_i32 = arith.constant 0 : i32
    %c0_i32_0 = arith.constant 0 : i32
    %c0_i32_1 = arith.constant 0 : i32
    return %c0_i32, %c0_i32_0 : i32, i32
  }
  func.func @transform_7(%arg0: i32) -> (i32, i32) {
    %c0_i32 = arith.constant 0 : i32
    %c0_i32_0 = arith.constant 0 : i32
    %c0_i32_1 = arith.constant 0 : i32
    return %c0_i32, %c0_i32_0 : i32, i32
  }
  func.func @transform_8(%arg0: i32) -> (i32, i32) {
    %c0_i32 = arith.constant 0 : i32
    %c0_i32_0 = arith.constant 0 : i32
    %c0_i32_1 = arith.constant 0 : i32
    return %c0_i32, %c0_i32_0 : i32, i32
  }
  func.func @transform_9(%arg0: i32) -> (i32, i32) {
    %c0_i32 = arith.constant 0 : i32
    %c0_i32_0 = arith.constant 0 : i32
    %c0_i32_1 = arith.constant 0 : i32
    return %c0_i32, %c0_i32_0 : i32, i32
  }
  func.func @transform_10(%arg0: i32) -> (i32, i32) {
    %c0_i32 = arith.constant 0 : i32
    %c0_i32_0 = arith.constant 0 : i32
    %c0_i32_1 = arith.constant 0 : i32
    return %c0_i32, %c0_i32_0 : i32, i32
  }
  func.func @transform_11(%arg0: i32) -> (i32, i32) {
    %c0_i32 = arith.constant 0 : i32
    %c0_i32_0 = arith.constant 0 : i32
    %c0_i32_1 = arith.constant 0 : i32
    return %c0_i32, %c0_i32_0 : i32, i32
  }
  func.func @transform_12(%arg0: i32) -> (i32, i32) {
    %c0_i32 = arith.constant 0 : i32
    %c0_i32_0 = arith.constant 0 : i32
    %c0_i32_1 = arith.constant 0 : i32
    return %c0_i32, %c0_i32_0 : i32, i32
  }
  func.func @transform_13(%arg0: i32) -> (i32, i32) {
    %c0_i32 = arith.constant 0 : i32
    %c0_i32_0 = arith.constant 0 : i32
    %c0_i32_1 = arith.constant 0 : i32
    return %c0_i32, %c0_i32_0 : i32, i32
  }
  func.func @transform_14(%arg0: i32) -> (i32, i32) {
    %c0_i32 = arith.constant 0 : i32
    %c0_i32_0 = arith.constant 0 : i32
    %c0_i32_1 = arith.constant 0 : i32
    return %c0_i32, %c0_i32_0 : i32, i32
  }
  func.func @transform_15(%arg0: i32) -> (i32, i32) {
    %c0_i32 = arith.constant 0 : i32
    %c0_i32_0 = arith.constant 0 : i32
    %c0_i32_1 = arith.constant 0 : i32
    return %c0_i32, %c0_i32_0 : i32, i32
  }
  func.func @transform_16(%arg0: i32) -> (i32, i32) {
    %c0_i32 = arith.constant 0 : i32
    %c0_i32_0 = arith.constant 0 : i32
    %c0_i32_1 = arith.constant 0 : i32
    return %c0_i32, %c0_i32_0 : i32, i32
  }
  func.func @transform_17(%arg0: i32) -> (i32, i32) {
    %c0_i32 = arith.constant 0 : i32
    %c0_i32_0 = arith.constant 0 : i32
    %c0_i32_1 = arith.constant 0 : i32
    return %c0_i32, %c0_i32_0 : i32, i32
  }
}

</mosaic_0001>

<llo_original>
// kernel: sequence_forward.1
$region0: #{sequence_forward.1}
  #allocation0 [shape = 'u32[]', space=smem, size = 0x4, offset = 0x4, fixed_abs, tag = 'smem constant byte address 0x4 - core index']
  #allocation1 [shape = 'u32[72,128]{1,0:T(1,128)}', space=vmem, size = 0x9000, scoped, tag = 'internal scratch']
  %s0 = inlined_call_operand.vmem [shape: f32[16,32], index: 0, kind: input, shape index: {}]
  %s1 = inlined_call_operand.vmem [shape: s32[8,1], index: 1, kind: input, shape index: {}]
  %s2 = inlined_call_operand.vmem [shape: f32[48,32], index: 2, kind: input, shape index: {}]
  %s3 = inlined_call_operand.vmem [shape: f32[32,96], index: 3, kind: input, shape index: {}]
  %s4 = inlined_call_operand.vmem [shape: f32[1,96], index: 4, kind: input, shape index: {}]
  %s5 = inlined_call_operand.vmem [shape: f32[32,32], index: 5, kind: input, shape index: {}]
  %s6 = inlined_call_operand.vmem [shape: f32[1,32], index: 6, kind: input, shape index: {}]
  %s7 = inlined_call_operand.vmem [shape: f32[32,128], index: 7, kind: input, shape index: {}]
  %s8 = inlined_call_operand.vmem [shape: f32[1,128], index: 8, kind: input, shape index: {}]
  %s9 = inlined_call_operand.vmem [shape: f32[128,32], index: 9, kind: input, shape index: {}]
  %s10 = inlined_call_operand.vmem [shape: f32[1,32], index: 10, kind: input, shape index: {}]
  %s11 = inlined_call_operand.vmem [shape: f32[1,32], index: 11, kind: input, shape index: {}]
  %s12 = inlined_call_operand.vmem [shape: f32[1,32], index: 12, kind: input, shape index: {}]
  %s13 = inlined_call_operand.vmem [shape: f32[1,32], index: 13, kind: input, shape index: {}]
  %s14 = inlined_call_operand.vmem [shape: f32[1,32], index: 14, kind: input, shape index: {}]
  %s15 = inlined_call_operand.vmem [shape: f32[32,32], index: 15, kind: input, shape index: {}]
  %s16 = inlined_call_operand.vmem [shape: f32[1,32], index: 16, kind: input, shape index: {}]
  %s17 = inlined_call_operand.vmem [shape: f32[16,32], index: 17, kind: output, shape index: {}]
  %s18 = sld [smem:[#allocation0]]
  $region78: #{sequence_forward.1} parent=0
    _
  %s20 = ssub.s32 1, %s18
  %s21 = scalar_select 0, %s20, %s18
  // Predicated region
  $region2: #{sequence_forward.1} parent=0 // pred_check
    _
  $region3: #{sequence_forward.1} parent=0 // pred_check_branch
    %23 = sbr.rel (0) target = $region5
  $region4: #{sequence_forward.1} parent=0 // pred_region
    _
  $region5: #{sequence_forward.1} parent=0 // pred_fallthru
    _
  // Predicated region
  $region6: #{sequence_forward.1} parent=0 // pred_check
    _
  $region7: #{sequence_forward.1} parent=0 // pred_check_branch
    %25 = sbr.rel (0) target = $region9
  $region8: #{sequence_forward.1} parent=0 // pred_region
    _
  $region9: #{sequence_forward.1} parent=0 // pred_fallthru
    _
  // Predicated region
  $region10: #{sequence_forward.1} parent=0 // pred_check
    _
  $region11: #{sequence_forward.1} parent=0 // pred_check_branch
    %27 = sbr.rel (0) target = $region13
  $region12: #{sequence_forward.1} parent=0 // pred_region
    _
  $region13: #{sequence_forward.1} parent=0 // pred_fallthru
    _
  // Predicated region
  $region14: #{sequence_forward.1} parent=0 // pred_check
    _
  $region15: #{sequence_forward.1} parent=0 // pred_check_branch
    %29 = sbr.rel (0) target = $region17
  $region16: #{sequence_forward.1} parent=0 // pred_region
    _
  $region17: #{sequence_forward.1} parent=0 // pred_fallthru
    _
  // Predicated region
  $region18: #{sequence_forward.1} parent=0 // pred_check
    _
  $region19: #{sequence_forward.1} parent=0 // pred_check_branch
    %31 = sbr.rel (0) target = $region21
  $region20: #{sequence_forward.1} parent=0 // pred_region
    _
  $region21: #{sequence_forward.1} parent=0 // pred_fallthru
    _
  // Predicated region
  $region22: #{sequence_forward.1} parent=0 // pred_check
    _
  $region23: #{sequence_forward.1} parent=0 // pred_check_branch
    %33 = sbr.rel (0) target = $region25
  $region24: #{sequence_forward.1} parent=0 // pred_region
    _
  $region25: #{sequence_forward.1} parent=0 // pred_fallthru
    _
  // Predicated region
  $region26: #{sequence_forward.1} parent=0 // pred_check
    _
  $region27: #{sequence_forward.1} parent=0 // pred_check_branch
    %35 = sbr.rel (0) target = $region29
  $region28: #{sequence_forward.1} parent=0 // pred_region
    _
  $region29: #{sequence_forward.1} parent=0 // pred_fallthru
    _
  // Predicated region
  $region30: #{sequence_forward.1} parent=0 // pred_check
    _
  $region31: #{sequence_forward.1} parent=0 // pred_check_branch
    %37 = sbr.rel (0) target = $region33
  $region32: #{sequence_forward.1} parent=0 // pred_region
    _
  $region33: #{sequence_forward.1} parent=0 // pred_fallthru
    _
  // Predicated region
  $region34: #{sequence_forward.1} parent=0 // pred_check
    _
  $region35: #{sequence_forward.1} parent=0 // pred_check_branch
    %39 = sbr.rel (0) target = $region37
  $region36: #{sequence_forward.1} parent=0 // pred_region
    _
  $region37: #{sequence_forward.1} parent=0 // pred_fallthru
    _
  // Predicated region
  $region38: #{sequence_forward.1} parent=0 // pred_check
    _
  $region39: #{sequence_forward.1} parent=0 // pred_check_branch
    %41 = sbr.rel (0) target = $region41
  $region40: #{sequence_forward.1} parent=0 // pred_region
    _
  $region41: #{sequence_forward.1} parent=0 // pred_fallthru
    _
  // Predicated region
  $region42: #{sequence_forward.1} parent=0 // pred_check
    _
  $region43: #{sequence_forward.1} parent=0 // pred_check_branch
    %43 = sbr.rel (0) target = $region45
  $region44: #{sequence_forward.1} parent=0 // pred_region
    _
  $region45: #{sequence_forward.1} parent=0 // pred_fallthru
    _
  // Predicated region
  $region46: #{sequence_forward.1} parent=0 // pred_check
    _
  $region47: #{sequence_forward.1} parent=0 // pred_check_branch
    %45 = sbr.rel (0) target = $region49
  $region48: #{sequence_forward.1} parent=0 // pred_region
    _
  $region49: #{sequence_forward.1} parent=0 // pred_fallthru
    _
  // Predicated region
  $region50: #{sequence_forward.1} parent=0 // pred_check
    _
  $region51: #{sequence_forward.1} parent=0 // pred_check_branch
    %47 = sbr.rel (0) target = $region53
  $region52: #{sequence_forward.1} parent=0 // pred_region
    _
  $region53: #{sequence_forward.1} parent=0 // pred_fallthru
    _
  // Predicated region
  $region54: #{sequence_forward.1} parent=0 // pred_check
    _
  $region55: #{sequence_forward.1} parent=0 // pred_check_branch
    %49 = sbr.rel (0) target = $region57
  $region56: #{sequence_forward.1} parent=0 // pred_region
    _
  $region57: #{sequence_forward.1} parent=0 // pred_fallthru
    _
  // Predicated region
  $region58: #{sequence_forward.1} parent=0 // pred_check
    _
  $region59: #{sequence_forward.1} parent=0 // pred_check_branch
    %51 = sbr.rel (0) target = $region61
  $region60: #{sequence_forward.1} parent=0 // pred_region
    _
  $region61: #{sequence_forward.1} parent=0 // pred_fallthru
    _
  // Predicated region
  $region62: #{sequence_forward.1} parent=0 // pred_check
    _
  $region63: #{sequence_forward.1} parent=0 // pred_check_branch
    %53 = sbr.rel (0) target = $region65
  $region64: #{sequence_forward.1} parent=0 // pred_region
    _
  $region65: #{sequence_forward.1} parent=0 // pred_fallthru
    _
  // Predicated region
  $region66: #{sequence_forward.1} parent=0 // pred_check
    _
  $region67: #{sequence_forward.1} parent=0 // pred_check_branch
    %55 = sbr.rel (0) target = $region69
  $region68: #{sequence_forward.1} parent=0 // pred_region
    _
  $region69: #{sequence_forward.1} parent=0 // pred_fallthru
    _
  %v56 = vld [vmem:[%s1] sm:$0xff]
  %v57 = vlaneseq
  %v58 = vand.u32 %v57, 127
  %59 = vset.pattern.permute.xlu0 0
  %60 = vperm.xlu0 %59, %v56
  %v61 = vpop.permute.xlu0 %60
  %vm62 = vcmp.eq.s32.totalorder %v58, %v61
  %v63 = vsel %vm62, 1, 0
  %v64 = vcvt.s32.f32 %v63
  %v65 = vld [vmem:[%s2] sm:$0xff]
  %v66 = vld [vmem:[%s2 + $0x8] sm:$0xff]
  %v67 = vld [vmem:[%s2 + $0x10] sm:$0xff]
  %v68 = vld [vmem:[%s2 + $0x18] sm:$0xff]
  %v69 = vld [vmem:[%s2 + $0x20] sm:$0xff]
  %v70 = vld [vmem:[%s2 + $0x28] sm:$0xff]
  %vm71 = vcmask 392192
  %v73 = vsel %vm71, %v64, 0
  %75 = vmatpush.msra.mxu0 0.0
  %76 = vmatpush.msra.mxu0 0.0
  %77 = vmatpush.msra.mxu0 0.0
  %78 = vmatpush.msra.mxu0 0.0
  %79 = vmatpush.msra.mxu0 0.0
  %80 = vmatpush.msra.mxu0 0.0
  %81 = vmatpush.msra.mxu0 0.0
  %82 = vmatpush.msra.mxu0 0.0
  %83 = vmatpush.msra.mxu0 0.0
  %84 = vmatpush.msra.mxu0 0.0
  %85 = vmatpush.msra.mxu0 %v70
  %86 = vmatpush.msra.mxu0 %v69
  %87 = vmatpush.msra.mxu0 %v68
  %88 = vmatpush.msra.mxu0 %v67
  %89 = vmatpush.msra.mxu0 %v66
  %90 = vmatpush.msra.mxu0 %v65
  %91 = vmatmul.f32.gmra.mxu0 %v73
  %v92 = vpop.f32.mrf.mxu0
  %v93 = vadd.f32 0.0, %v92
  %94 = vdwg.mxu0
  %v95 = vld [vmem:[%s0] sm:$0xff]
  %v96 = vld [vmem:[%s0 + $0x8] sm:$0xff]
  %v97 = vadd.f32 %v95, %v93
  %v98 = vadd.f32 %v96, %v93
  %v99 = vlaneseq
  %v100 = vshrl.u32 %v99, 7
  %v101 = vadd.s32 %v100, 8
  %v102 = vadd.s32 %v100, 16
  %v103 = vadd.s32 %v100, 24
  %v104 = vadd.s32 %v100, 32
  %v105 = vadd.s32 %v100, 40
  %v106 = vadd.s32 %v100, 48
  %v107 = vadd.s32 %v100, 56
  %v108 = vshra.s32 %v100, 4
  %v109 = vshra.s32 %v101, 4
  %v110 = vshra.s32 %v102, 4
  %v111 = vshra.s32 %v103, 4
  %v112 = vshra.s32 %v104, 4
  %v113 = vshra.s32 %v105, 4
  %v114 = vshra.s32 %v106, 4
  %v115 = vshra.s32 %v107, 4
  %v116 = vshra.s32 %v58, 3
  %vm117 = vcmp.eq.s32.totalorder %v108, %v116
  %vm118 = vcmp.eq.s32.totalorder %v109, %v116
  %vm119 = vcmp.eq.s32.totalorder %v110, %v116
  %vm120 = vcmp.eq.s32.totalorder %v111, %v116
  %vm121 = vcmp.eq.s32.totalorder %v112, %v116
  %vm122 = vcmp.eq.s32.totalorder %v113, %v116
  %vm123 = vcmp.eq.s32.totalorder %v114, %v116
  %vm124 = vcmp.eq.s32.totalorder %v115, %v116
  %v125 = vsel %vm117, 1, 0
  %v126 = vsel %vm118, 1, 0
  %v127 = vsel %vm119, 1, 0
  %v128 = vsel %vm120, 1, 0
  %v129 = vsel %vm121, 1, 0
  %v130 = vsel %vm122, 1, 0
  %v131 = vsel %vm123, 1, 0
  %v132 = vsel %vm124, 1, 0
  %v133 = vcvt.s32.f32 %v125
  %v134 = vcvt.s32.f32 %v126
  %v135 = vcvt.s32.f32 %v127
  %v136 = vcvt.s32.f32 %v128
  %v137 = vcvt.s32.f32 %v129
  %v138 = vcvt.s32.f32 %v130
  %v139 = vcvt.s32.f32 %v131
  %v140 = vcvt.s32.f32 %v132
  %v141 = vshra.s32 %v100, 3
  %v142 = vshra.s32 %v101, 3
  %v143 = vand.u32 %v58, 15
  %v144 = vshra.s32 %v143, 3
  %vm145 = vcmp.eq.s32.totalorder %v141, %v144
  %vm146 = vcmp.eq.s32.totalorder %v142, %v144
  %v147 = vsel %vm145, 0.0, -1e+30
  %v148 = vsel %vm146, 0.0, -1e+30
  %v149 = vld [vmem:[%s3] sm:$0xff]
  %v150 = vld [vmem:[%s3 + $0x8] sm:$0xff]
  %v151 = vld [vmem:[%s3 + $0x10] sm:$0xff]
  %v152 = vld [vmem:[%s3 + $0x18] sm:$0xff]
  %v153 = vld [vmem:[%s4] sm:$0x1]
  %v154 = vld [vmem:[%s5] sm:$0xff]
  %v155 = vld [vmem:[%s5 + $0x8] sm:$0xff]
  %v156 = vld [vmem:[%s5 + $0x10] sm:$0xff]
  %v157 = vld [vmem:[%s5 + $0x18] sm:$0xff]
  %v158 = vld [vmem:[%s6] sm:$0x1]
  %v159 = vld [vmem:[%s7] sm:$0xff]
  %v160 = vld [vmem:[%s7 + $0x8] sm:$0xff]
  %v161 = vld [vmem:[%s7 + $0x10] sm:$0xff]
  %v162 = vld [vmem:[%s7 + $0x18] sm:$0xff]
  %v163 = vld [vmem:[%s8] sm:$0x1]
  %v164 = vld [vmem:[%s9] sm:$0xff]
  %v165 = vld [vmem:[%s9 + $0x8] sm:$0xff]
  %v166 = vld [vmem:[%s9 + $0x10] sm:$0xff]
  %v167 = vld [vmem:[%s9 + $0x18] sm:$0xff]
  %v168 = vld [vmem:[%s9 + $0x20] sm:$0xff]
  %v169 = vld [vmem:[%s9 + $0x28] sm:$0xff]
  %v170 = vld [vmem:[%s9 + $0x30] sm:$0xff]
  %v171 = vld [vmem:[%s9 + $0x38] sm:$0xff]
  %v172 = vld [vmem:[%s9 + $0x40] sm:$0xff]
  %v173 = vld [vmem:[%s9 + $0x48] sm:$0xff]
  %v174 = vld [vmem:[%s9 + $0x50] sm:$0xff]
  %v175 = vld [vmem:[%s9 + $0x58] sm:$0xff]
  %v176 = vld [vmem:[%s9 + $0x60] sm:$0xff]
  %v177 = vld [vmem:[%s9 + $0x68] sm:$0xff]
  %v178 = vld [vmem:[%s9 + $0x70] sm:$0xff]
  %v179 = vld [vmem:[%s9 + $0x78] sm:$0xff]
  %v180 = vld [vmem:[%s10] sm:$0x1]
  %v181 = vld [vmem:[%s11] sm:$0x1]
  %v182 = vld [vmem:[%s12] sm:$0x1]
  %v183 = vld [vmem:[%s13] sm:$0x1]
  %v184 = vld [vmem:[%s14] sm:$0x1]
  %v186 = vperm.slane %v153, 0
  %vm188 = vcmask 261120
  %v190 = vsel %vm188, %v97, 0
  %v193 = vsel %vm188, %v98, 0
  %195 = vmatpush.msra.mxu0 0.0
  %196 = vmatpush.msra.mxu0 0.0
  %197 = vmatpush.msra.mxu0 0.0
  %198 = vmatpush.msra.mxu0 0.0
  %199 = vmatpush.msra.mxu0 0.0
  %200 = vmatpush.msra.mxu0 0.0
  %201 = vmatpush.msra.mxu0 0.0
  %202 = vmatpush.msra.mxu0 0.0
  %203 = vmatpush.msra.mxu0 0.0
  %204 = vmatpush.msra.mxu0 0.0
  %205 = vmatpush.msra.mxu0 0.0
  %206 = vmatpush.msra.mxu0 0.0
  %207 = vmatpush.msra.mxu0 %v152
  %208 = vmatpush.msra.mxu0 %v151
  %209 = vmatpush.msra.mxu0 %v150
  %210 = vmatpush.msra.mxu0 %v149
  %211 = vmatmul.f32.gmra.mxu0 %v190
  %v212 = vpop.f32.mrf.mxu0
  %v213 = vadd.f32 %v186, %v212
  %214 = vmatmul.f32.gmra.mxu0 %v193
  %v215 = vpop.f32.mrf.mxu0
  %v216 = vadd.f32 %v186, %v215
  %217 = vdwg.mxu0
  %226 = vrot.lane.b32.xlu0 %v133, 32
  %v227 = vpop.permute.xlu0 %226
  %228 = vrot.lane.b32.xlu0 %v134, 32
  %v229 = vpop.permute.xlu0 %228
  %230 = vrot.lane.b32.xlu0 %v135, 32
  %v231 = vpop.permute.xlu0 %230
  %232 = vrot.lane.b32.xlu0 %v136, 32
  %v233 = vpop.permute.xlu0 %232
  %234 = vrot.lane.b32.xlu0 %v137, 32
  %v235 = vpop.permute.xlu0 %234
  %236 = vrot.lane.b32.xlu0 %v138, 32
  %v237 = vpop.permute.xlu0 %236
  %238 = vrot.lane.b32.xlu0 %v139, 32
  %v239 = vpop.permute.xlu0 %238
  %240 = vrot.lane.b32.xlu0 %v140, 32
  %v241 = vpop.permute.xlu0 %240
  %v250 = vmul.f32 %v213, %v227
  %v251 = vmul.f32 %v216, %v229
  %v252 = vmul.f32 %v213, %v231
  %v253 = vmul.f32 %v216, %v233
  %v254 = vmul.f32 %v213, %v235
  %v255 = vmul.f32 %v216, %v237
  %v256 = vmul.f32 %v213, %v239
  %v257 = vmul.f32 %v216, %v241
  %258 = vrot.lane.b32.xlu0 %v133, 64
  %v259 = vpop.permute.xlu0 %258
  %260 = vrot.lane.b32.xlu0 %v134, 64
  %v261 = vpop.permute.xlu0 %260
  %262 = vrot.lane.b32.xlu0 %v135, 64
  %v263 = vpop.permute.xlu0 %262
  %264 = vrot.lane.b32.xlu0 %v136, 64
  %v265 = vpop.permute.xlu0 %264
  %266 = vrot.lane.b32.xlu0 %v137, 64
  %v267 = vpop.permute.xlu0 %266
  %268 = vrot.lane.b32.xlu0 %v138, 64
  %v269 = vpop.permute.xlu0 %268
  %270 = vrot.lane.b32.xlu0 %v139, 64
  %v271 = vpop.permute.xlu0 %270
  %272 = vrot.lane.b32.xlu0 %v140, 64
  %v273 = vpop.permute.xlu0 %272
  %v282 = vmul.f32 %v213, %v259
  %v283 = vmul.f32 %v216, %v261
  %v284 = vmul.f32 %v213, %v263
  %v285 = vmul.f32 %v216, %v265
  %v286 = vmul.f32 %v213, %v267
  %v287 = vmul.f32 %v216, %v269
  %v288 = vmul.f32 %v213, %v271
  %v289 = vmul.f32 %v216, %v273
  %298 = vrot.lane.b32.xlu0 %v250, 96
  %v299 = vpop.permute.xlu0 %298
  %300 = vrot.lane.b32.xlu0 %v251, 96
  %v301 = vpop.permute.xlu0 %300
  %302 = vrot.lane.b32.xlu0 %v252, 96
  %v303 = vpop.permute.xlu0 %302
  %304 = vrot.lane.b32.xlu0 %v253, 96
  %v305 = vpop.permute.xlu0 %304
  %306 = vrot.lane.b32.xlu0 %v254, 96
  %v307 = vpop.permute.xlu0 %306
  %308 = vrot.lane.b32.xlu0 %v255, 96
  %v309 = vpop.permute.xlu0 %308
  %310 = vrot.lane.b32.xlu0 %v256, 96
  %v311 = vpop.permute.xlu0 %310
  %312 = vrot.lane.b32.xlu0 %v257, 96
  %v313 = vpop.permute.xlu0 %312
  %v315 = vsel %vm188, %v213, 0
  %v318 = vsel %vm188, %v216, 0
  %v320 = vsel %vm188, %v299, 0
  %v322 = vsel %vm188, %v301, 0
  %v324 = vsel %vm188, %v303, 0
  %v326 = vsel %vm188, %v305, 0
  %v328 = vsel %vm188, %v307, 0
  %v330 = vsel %vm188, %v309, 0
  %v332 = vsel %vm188, %v311, 0
  %v334 = vsel %vm188, %v313, 0
  %336 = vmatpush.xpose.msra.mxu0 0.0
  %337 = vmatpush.xpose.msra.mxu0 0.0
  %338 = vmatpush.xpose.msra.mxu0 0.0
  %339 = vmatpush.xpose.msra.mxu0 0.0
  %340 = vmatpush.xpose.msra.mxu0 0.0
  %341 = vmatpush.xpose.msra.mxu0 0.0
  %342 = vmatpush.xpose.msra.mxu0 0.0
  %343 = vmatpush.xpose.msra.mxu0 0.0
  %344 = vmatpush.xpose.msra.mxu0 %v334
  %345 = vmatpush.xpose.msra.mxu0 %v332
  %346 = vmatpush.xpose.msra.mxu0 %v330
  %347 = vmatpush.xpose.msra.mxu0 %v328
  %348 = vmatpush.xpose.msra.mxu0 %v326
  %349 = vmatpush.xpose.msra.mxu0 %v324
  %350 = vmatpush.xpose.msra.mxu0 %v322
  %351 = vmatpush.xpose.msra.mxu0 %v320
  %352 = vmatmul.f32.gmra.mxu0 %v315
  %v353 = vpop.f32.mrf.mxu0
  %v354 = vadd.f32 %v147, %v353
  %355 = vmatmul.f32.gmra.mxu0 %v318
  %v356 = vpop.f32.mrf.mxu0
  %v357 = vadd.f32 %v148, %v356
  %358 = vdwg.mxu0
  %vm359 = vcmask 523264
  %v360 = vsel %vm359, %v354, -inf
  %361 = vmax.xlane.f32.xlu0 %v360
  %v362 = vpop.xlane.xlu0 %361
  %v363 = vsel %vm359, %v357, -inf
  %364 = vmax.xlane.f32.xlu0 %v363
  %v365 = vpop.xlane.xlu0 %364
  %v366 = vsub.f32 %v354, %v362
  %v367 = vsub.f32 %v357, %v365
  %v368 = vmul.f32 %v366, 1.442695
  %v369 = vpow.pop %v368
  %v370 = vmul.f32 %v367, 1.442695
  %v371 = vpow.pop %v370
  %v373 = vsel %vm359, %v369, 0
  %v376 = vsel %vm359, %v371, 0
  %378 = vmatpush.msra.mxu0 0.0
  %379 = vmatpush.msra.mxu0 0.0
  %380 = vmatpush.msra.mxu0 0.0
  %381 = vmatpush.msra.mxu0 0.0
  %382 = vmatpush.msra.mxu0 0.0
  %383 = vmatpush.msra.mxu0 0.0
  %384 = vmatpush.msra.mxu0 0.0
  %385 = vmatpush.msra.mxu0 0.0
  %386 = vmatpush.msra.mxu0 %v140
  %387 = vmatpush.msra.mxu0 %v139
  %388 = vmatpush.msra.mxu0 %v138
  %389 = vmatpush.msra.mxu0 %v137
  %390 = vmatpush.msra.mxu0 %v136
  %391 = vmatpush.msra.mxu0 %v135
  %392 = vmatpush.msra.mxu0 %v134
  %393 = vmatpush.msra.mxu0 %v133
  %394 = vmatmul.f32.gmra.mxu0 %v373
  %v395 = vpop.f32.mrf.mxu0
  %v396 = vadd.f32 0.0, %v395
  %397 = vmatmul.f32.gmra.mxu0 %v376
  %v398 = vpop.f32.mrf.mxu0
  %v399 = vadd.f32 0.0, %v398
  %400 = vdwg.mxu0
  %409 = vrot.lane.b32.xlu0 %v282, 64
  %v410 = vpop.permute.xlu0 %409
  %411 = vrot.lane.b32.xlu0 %v283, 64
  %v412 = vpop.permute.xlu0 %411
  %413 = vrot.lane.b32.xlu0 %v284, 64
  %v414 = vpop.permute.xlu0 %413
  %415 = vrot.lane.b32.xlu0 %v285, 64
  %v416 = vpop.permute.xlu0 %415
  %417 = vrot.lane.b32.xlu0 %v286, 64
  %v418 = vpop.permute.xlu0 %417
  %419 = vrot.lane.b32.xlu0 %v287, 64
  %v420 = vpop.permute.xlu0 %419
  %421 = vrot.lane.b32.xlu0 %v288, 64
  %v422 = vpop.permute.xlu0 %421
  %423 = vrot.lane.b32.xlu0 %v289, 64
  %v424 = vpop.permute.xlu0 %423
  %433 = vmatpush.msra.mxu0 0.0
  %434 = vmatpush.msra.mxu0 0.0
  %435 = vmatpush.msra.mxu0 0.0
  %436 = vmatpush.msra.mxu0 0.0
  %437 = vmatpush.msra.mxu0 0.0
  %438 = vmatpush.msra.mxu0 0.0
  %439 = vmatpush.msra.mxu0 0.0
  %440 = vmatpush.msra.mxu0 0.0
  %441 = vmatpush.msra.mxu0 %v424
  %442 = vmatpush.msra.mxu0 %v422
  %443 = vmatpush.msra.mxu0 %v420
  %444 = vmatpush.msra.mxu0 %v418
  %445 = vmatpush.msra.mxu0 %v416
  %446 = vmatpush.msra.mxu0 %v414
  %447 = vmatpush.msra.mxu0 %v412
  %448 = vmatpush.msra.mxu0 %v410
  %449 = vmatmul.f32.gmra.mxu0 %v373
  %v450 = vpop.f32.mrf.mxu0
  %v451 = vadd.f32 0.0, %v450
  %452 = vmatmul.f32.gmra.mxu0 %v376
  %v453 = vpop.f32.mrf.mxu0
  %v454 = vadd.f32 0.0, %v453
  %455 = vdwg.mxu0
  %v456 = vrcp.pop %v396
  %v457 = vmul.f32 %v396, %v456
  %v458 = vsub.f32 1.0, %v457
  %v459 = vmul.f32 %v456, %v458
  %v460 = vadd.f32 %v456, %v459
  %vm461 = vweird.f32 %v396
  %vm462 = vweird.f32 %v456
  %vm463 = vmor %vm461, %vm462
  %v464 = vsel %vm463, %v456, %v460
  %v465 = vand.u32 2147483647, %v396
  %vm466 = vcmp.eq.f32.partialorder %v465, 8.507059e+37
  %v467 = vand.u32 %v396, 2147483648
  %v468 = vor.u32 1.1754944e-38, %v467
  %v469 = vsel %vm466, %v468, %v464
  %v470 = vrcp.pop %v399
  %v471 = vmul.f32 %v399, %v470
  %v472 = vsub.f32 1.0, %v471
  %v473 = vmul.f32 %v470, %v472
  %v474 = vadd.f32 %v470, %v473
  %vm475 = vweird.f32 %v399
  %vm476 = vweird.f32 %v470
  %vm477 = vmor %vm475, %vm476
  %v478 = vsel %vm477, %v470, %v474
  %v479 = vand.u32 2147483647, %v399
  %vm480 = vcmp.eq.f32.partialorder %v479, 8.507059e+37
  %v481 = vand.u32 %v399, 2147483648
  %v482 = vor.u32 1.1754944e-38, %v481
  %v483 = vsel %vm480, %v482, %v478
  %v484 = vmul.f32 %v451, %v469
  %v485 = vmul.f32 %v454, %v483
  %v487 = vperm.slane %v158, 0
  %v490 = vsel %vm188, %v484, 0
  %v493 = vsel %vm188, %v485, 0
  %495 = vmatpush.msra.mxu0 0.0
  %496 = vmatpush.msra.mxu0 0.0
  %497 = vmatpush.msra.mxu0 0.0
  %498 = vmatpush.msra.mxu0 0.0
  %499 = vmatpush.msra.mxu0 0.0
  %500 = vmatpush.msra.mxu0 0.0
  %501 = vmatpush.msra.mxu0 0.0
  %502 = vmatpush.msra.mxu0 0.0
  %503 = vmatpush.msra.mxu0 0.0
  %504 = vmatpush.msra.mxu0 0.0
  %505 = vmatpush.msra.mxu0 0.0
  %506 = vmatpush.msra.mxu0 0.0
  %507 = vmatpush.msra.mxu0 %v157
  %508 = vmatpush.msra.mxu0 %v156
  %509 = vmatpush.msra.mxu0 %v155
  %510 = vmatpush.msra.mxu0 %v154
  %511 = vmatmul.f32.gmra.mxu0 %v490
  %v512 = vpop.f32.mrf.mxu0
  %v513 = vadd.f32 %v487, %v512
  %514 = vmatmul.f32.gmra.mxu0 %v493
  %v515 = vpop.f32.mrf.mxu0
  %v516 = vadd.f32 %v487, %v515
  %517 = vdwg.mxu0
  %v518 = vadd.f32 %v97, %v513
  %v519 = vadd.f32 %v98, %v516
  %v520 = vsel %vm188, %v518, 0.0
  %521 = vadd.xlane.f32.xlu0 %v520
  %v522 = vpop.xlane.xlu0 %521
  %v523 = vsel %vm188, %v519, 0.0
  %524 = vadd.xlane.f32.xlu0 %v523
  %v525 = vpop.xlane.xlu0 %524
  %v526 = vrcp.pop 32.0
  %v527 = vmul.f32 32.0, %v526
  %v528 = vsub.f32 1.0, %v527
  %v529 = vmul.f32 %v526, %v528
  %v530 = vadd.f32 %v526, %v529
  %vm531 = vweird.f32 %v526
  %v532 = vsel %vm531, %v526, %v530
  %v533 = vmul.f32 %v522, %v532
  %v534 = vmul.f32 %v525, %v532
  %v535 = vsub.f32 %v518, %v533
  %v536 = vsub.f32 %v519, %v534
  %v537 = vmul.f32 %v535, %v535
  %v538 = vmul.f32 %v536, %v536
  %v539 = vsel %vm188, %v537, 0.0
  %540 = vadd.xlane.f32.xlu0 %v539
  %v541 = vpop.xlane.xlu0 %540
  %v542 = vsel %vm188, %v538, 0.0
  %543 = vadd.xlane.f32.xlu0 %v542
  %v544 = vpop.xlane.xlu0 %543
  %v545 = vmul.f32 %v541, %v532
  %v546 = vmul.f32 %v544, %v532
  %v547 = vadd.f32 %v545, 1e-05
  %v548 = vadd.f32 %v546, 1e-05
  %v549 = vrsqrt.pop %v547
  %v550 = vmul.f32 %v549, %v547
  %v551 = vmul.f32 %v550, %v549
  %v552 = vmul.f32 0.5, %v551
  %v553 = vsub.f32 1.5, %v552
  %v554 = vmul.f32 %v549, %v553
  %vm555 = vweird.f32 %v547
  %vm556 = vweird.f32 %v549
  %vm557 = vmor %vm555, %vm556
  %v558 = vsel %vm557, %v549, %v554
  %v559 = vrsqrt.pop %v548
  %v560 = vmul.f32 %v559, %v548
  %v561 = vmul.f32 %v560, %v559
  %v562 = vmul.f32 0.5, %v561
  %v563 = vsub.f32 1.5, %v562
  %v564 = vmul.f32 %v559, %v563
  %vm565 = vweird.f32 %v548
  %vm566 = vweird.f32 %v559
  %vm567 = vmor %vm565, %vm566
  %v568 = vsel %vm567, %v559, %v564
  %v569 = vmul.f32 %v535, %v558
  %v570 = vmul.f32 %v536, %v568
  %v572 = vperm.slane %v181, 0
  %v574 = vmul.f32 %v569, %v572
  %v575 = vmul.f32 %v570, %v572
  %v577 = vperm.slane %v182, 0
  %v579 = vadd.f32 %v574, %v577
  %v580 = vadd.f32 %v575, %v577
  %v582 = vperm.slane %v163, 0
  %v585 = vsel %vm188, %v579, 0
  %v588 = vsel %vm188, %v580, 0
  %590 = vmatpush.msra.mxu0 0.0
  %591 = vmatpush.msra.mxu0 0.0
  %592 = vmatpush.msra.mxu0 0.0
  %593 = vmatpush.msra.mxu0 0.0
  %594 = vmatpush.msra.mxu0 0.0
  %595 = vmatpush.msra.mxu0 0.0
  %596 = vmatpush.msra.mxu0 0.0
  %597 = vmatpush.msra.mxu0 0.0
  %598 = vmatpush.msra.mxu0 0.0
  %599 = vmatpush.msra.mxu0 0.0
  %600 = vmatpush.msra.mxu0 0.0
  %601 = vmatpush.msra.mxu0 0.0
  %602 = vmatpush.msra.mxu0 %v162
  %603 = vmatpush.msra.mxu0 %v161
  %604 = vmatpush.msra.mxu0 %v160
  %605 = vmatpush.msra.mxu0 %v159
  %606 = vmatmul.f32.gmra.mxu0 %v585
  %v607 = vpop.f32.mrf.mxu0
  %v608 = vadd.f32 %v582, %v607
  %609 = vmatmul.f32.gmra.mxu0 %v588
  %v610 = vpop.f32.mrf.mxu0
  %v611 = vadd.f32 %v582, %v610
  %612 = vdwg.mxu0
  %v613 = vmax.f32 %v608, 0.0
  %v614 = vmax.f32 %v611, 0.0
  %v616 = vperm.slane %v180, 0
  %618 = vmatpush.msra.mxu0 %v179
  %619 = vmatpush.msra.mxu0 %v178
  %620 = vmatpush.msra.mxu0 %v177
  %621 = vmatpush.msra.mxu0 %v176
  %622 = vmatpush.msra.mxu0 %v175
  %623 = vmatpush.msra.mxu0 %v174
  %624 = vmatpush.msra.mxu0 %v173
  %625 = vmatpush.msra.mxu0 %v172
  %626 = vmatpush.msra.mxu0 %v171
  %627 = vmatpush.msra.mxu0 %v170
  %628 = vmatpush.msra.mxu0 %v169
  %629 = vmatpush.msra.mxu0 %v168
  %630 = vmatpush.msra.mxu0 %v167
  %631 = vmatpush.msra.mxu0 %v166
  %632 = vmatpush.msra.mxu0 %v165
  %633 = vmatpush.msra.mxu0 %v164
  %634 = vmatmul.f32.gmra.mxu0 %v613
  %v635 = vpop.f32.mrf.mxu0
  %v636 = vadd.f32 %v616, %v635
  %637 = vmatmul.f32.gmra.mxu0 %v614
  %v638 = vpop.f32.mrf.mxu0
  %v639 = vadd.f32 %v616, %v638
  %640 = vdwg.mxu0
  %v641 = vadd.f32 %v579, %v636
  %v642 = vadd.f32 %v580, %v639
  %v643 = vsel %vm188, %v641, 0.0
  %644 = vadd.xlane.f32.xlu0 %v643
  %v645 = vpop.xlane.xlu0 %644
  %v646 = vsel %vm188, %v642, 0.0
  %647 = vadd.xlane.f32.xlu0 %v646
  %v648 = vpop.xlane.xlu0 %647
  %v649 = vmul.f32 %v645, %v532
  %v650 = vmul.f32 %v648, %v532
  %v651 = vsub.f32 %v641, %v649
  %v652 = vsub.f32 %v642, %v650
  %v653 = vmul.f32 %v651, %v651
  %v654 = vmul.f32 %v652, %v652
  %v655 = vsel %vm188, %v653, 0.0
  %656 = vadd.xlane.f32.xlu0 %v655
  %v657 = vpop.xlane.xlu0 %656
  %v658 = vsel %vm188, %v654, 0.0
  %659 = vadd.xlane.f32.xlu0 %v658
  %v660 = vpop.xlane.xlu0 %659
  %v661 = vmul.f32 %v657, %v532
  %v662 = vmul.f32 %v660, %v532
  %v663 = vadd.f32 %v661, 1e-05
  %v664 = vadd.f32 %v662, 1e-05
  %v665 = vrsqrt.pop %v663
  %v666 = vmul.f32 %v665, %v663
  %v667 = vmul.f32 %v666, %v665
  %v668 = vmul.f32 0.5, %v667
  %v669 = vsub.f32 1.5, %v668
  %v670 = vmul.f32 %v665, %v669
  %vm671 = vweird.f32 %v663
  %vm672 = vweird.f32 %v665
  %vm673 = vmor %vm671, %vm672
  %v674 = vsel %vm673, %v665, %v670
  %v675 = vrsqrt.pop %v664
  %v676 = vmul.f32 %v675, %v664
  %v677 = vmul.f32 %v676, %v675
  %v678 = vmul.f32 0.5, %v677
  %v679 = vsub.f32 1.5, %v678
  %v680 = vmul.f32 %v675, %v679
  %vm681 = vweird.f32 %v664
  %vm682 = vweird.f32 %v675
  %vm683 = vmor %vm681, %vm682
  %v684 = vsel %vm683, %v675, %v680
  %v685 = vmul.f32 %v651, %v674
  %v686 = vmul.f32 %v652, %v684
  %v688 = vperm.slane %v183, 0
  %v690 = vmul.f32 %v685, %v688
  %v691 = vmul.f32 %v686, %v688
  %v693 = vperm.slane %v184, 0
  %v695 = vadd.f32 %v690, %v693
  %v696 = vadd.f32 %v691, %v693
  %v698 = vsel %vm188, %v695, 0
  %v701 = vsel %vm188, %v696, 0
  %703 = vmatpush.msra.mxu0 0.0
  %704 = vmatpush.msra.mxu0 0.0
  %705 = vmatpush.msra.mxu0 0.0
  %706 = vmatpush.msra.mxu0 0.0
  %707 = vmatpush.msra.mxu0 0.0
  %708 = vmatpush.msra.mxu0 0.0
  %709 = vmatpush.msra.mxu0 0.0
  %710 = vmatpush.msra.mxu0 0.0
  %711 = vmatpush.msra.mxu0 0.0
  %712 = vmatpush.msra.mxu0 0.0
  %713 = vmatpush.msra.mxu0 0.0
  %714 = vmatpush.msra.mxu0 0.0
  %715 = vmatpush.msra.mxu0 %v152
  %716 = vmatpush.msra.mxu0 %v151
  %717 = vmatpush.msra.mxu0 %v150
  %718 = vmatpush.msra.mxu0 %v149
  %719 = vmatmul.f32.gmra.mxu0 %v698
  %v720 = vpop.f32.mrf.mxu0
  %v721 = vadd.f32 %v186, %v720
  %722 = vmatmul.f32.gmra.mxu0 %v701
  %v723 = vpop.f32.mrf.mxu0
  %v724 = vadd.f32 %v186, %v723
  %725 = vdwg.mxu0
  %v726 = vmul.f32 %v721, %v227
  %v727 = vmul.f32 %v724, %v229
  %v728 = vmul.f32 %v721, %v231
  %v729 = vmul.f32 %v724, %v233
  %v730 = vmul.f32 %v721, %v235
  %v731 = vmul.f32 %v724, %v237
  %v732 = vmul.f32 %v721, %v239
  %v733 = vmul.f32 %v724, %v241
  %v734 = vmul.f32 %v721, %v259
  %v735 = vmul.f32 %v724, %v261
  %v736 = vmul.f32 %v721, %v263
  %v737 = vmul.f32 %v724, %v265
  %v738 = vmul.f32 %v721, %v267
  %v739 = vmul.f32 %v724, %v269
  %v740 = vmul.f32 %v721, %v271
  %v741 = vmul.f32 %v724, %v273
  %750 = vrot.lane.b32.xlu0 %v726, 96
  %v751 = vpop.permute.xlu0 %750
  %752 = vrot.lane.b32.xlu0 %v727, 96
  %v753 = vpop.permute.xlu0 %752
  %754 = vrot.lane.b32.xlu0 %v728, 96
  %v755 = vpop.permute.xlu0 %754
  %756 = vrot.lane.b32.xlu0 %v729, 96
  %v757 = vpop.permute.xlu0 %756
  %758 = vrot.lane.b32.xlu0 %v730, 96
  %v759 = vpop.permute.xlu0 %758
  %760 = vrot.lane.b32.xlu0 %v731, 96
  %v761 = vpop.permute.xlu0 %760
  %762 = vrot.lane.b32.xlu0 %v732, 96
  %v763 = vpop.permute.xlu0 %762
  %764 = vrot.lane.b32.xlu0 %v733, 96
  %v765 = vpop.permute.xlu0 %764
  %v767 = vsel %vm188, %v721, 0
  %v770 = vsel %vm188, %v724, 0
  %v772 = vsel %vm188, %v751, 0
  %v774 = vsel %vm188, %v753, 0
  %v776 = vsel %vm188, %v755, 0
  %v778 = vsel %vm188, %v757, 0
  %v780 = vsel %vm188, %v759, 0
  %v782 = vsel %vm188, %v761, 0
  %v784 = vsel %vm188, %v763, 0
  %v786 = vsel %vm188, %v765, 0
  %788 = vmatpush.xpose.msra.mxu0 0.0
  %789 = vmatpush.xpose.msra.mxu0 0.0
  %790 = vmatpush.xpose.msra.mxu0 0.0
  %791 = vmatpush.xpose.msra.mxu0 0.0
  %792 = vmatpush.xpose.msra.mxu0 0.0
  %793 = vmatpush.xpose.msra.mxu0 0.0
  %794 = vmatpush.xpose.msra.mxu0 0.0
  %795 = vmatpush.xpose.msra.mxu0 0.0
  %796 = vmatpush.xpose.msra.mxu0 %v786
  %797 = vmatpush.xpose.msra.mxu0 %v784
  %798 = vmatpush.xpose.msra.mxu0 %v782
  %799 = vmatpush.xpose.msra.mxu0 %v780
  %800 = vmatpush.xpose.msra.mxu0 %v778
  %801 = vmatpush.xpose.msra.mxu0 %v776
  %802 = vmatpush.xpose.msra.mxu0 %v774
  %803 = vmatpush.xpose.msra.mxu0 %v772
  %804 = vmatmul.f32.gmra.mxu0 %v767
  %v805 = vpop.f32.mrf.mxu0
  %v806 = vadd.f32 %v147, %v805
  %807 = vmatmul.f32.gmra.mxu0 %v770
  %v808 = vpop.f32.mrf.mxu0
  %v809 = vadd.f32 %v148, %v808
  %810 = vdwg.mxu0
  %v811 = vsel %vm359, %v806, -inf
  %812 = vmax.xlane.f32.xlu0 %v811
  %v813 = vpop.xlane.xlu0 %812
  %v814 = vsel %vm359, %v809, -inf
  %815 = vmax.xlane.f32.xlu0 %v814
  %v816 = vpop.xlane.xlu0 %815
  %v817 = vsub.f32 %v806, %v813
  %v818 = vsub.f32 %v809, %v816
  %v819 = vmul.f32 %v817, 1.442695
  %v820 = vpow.pop %v819
  %v821 = vmul.f32 %v818, 1.442695
  %v822 = vpow.pop %v821
  %v824 = vsel %vm359, %v820, 0
  %v827 = vsel %vm359, %v822, 0
  %829 = vmatpush.msra.mxu0 0.0
  %830 = vmatpush.msra.mxu0 0.0
  %831 = vmatpush.msra.mxu0 0.0
  %832 = vmatpush.msra.mxu0 0.0
  %833 = vmatpush.msra.mxu0 0.0
  %834 = vmatpush.msra.mxu0 0.0
  %835 = vmatpush.msra.mxu0 0.0
  %836 = vmatpush.msra.mxu0 0.0
  %837 = vmatpush.msra.mxu0 %v140
  %838 = vmatpush.msra.mxu0 %v139
  %839 = vmatpush.msra.mxu0 %v138
  %840 = vmatpush.msra.mxu0 %v137
  %841 = vmatpush.msra.mxu0 %v136
  %842 = vmatpush.msra.mxu0 %v135
  %843 = vmatpush.msra.mxu0 %v134
  %844 = vmatpush.msra.mxu0 %v133
  %845 = vmatmul.f32.gmra.mxu0 %v824
  %v846 = vpop.f32.mrf.mxu0
  %v847 = vadd.f32 0.0, %v846
  %848 = vmatmul.f32.gmra.mxu0 %v827
  %v849 = vpop.f32.mrf.mxu0
  %v850 = vadd.f32 0.0, %v849
  %851 = vdwg.mxu0
  %860 = vrot.lane.b32.xlu0 %v734, 64
  %v861 = vpop.permute.xlu0 %860
  %862 = vrot.lane.b32.xlu0 %v735, 64
  %v863 = vpop.permute.xlu0 %862
  %864 = vrot.lane.b32.xlu0 %v736, 64
  %v865 = vpop.permute.xlu0 %864
  %866 = vrot.lane.b32.xlu0 %v737, 64
  %v867 = vpop.permute.xlu0 %866
  %868 = vrot.lane.b32.xlu0 %v738, 64
  %v869 = vpop.permute.xlu0 %868
  %870 = vrot.lane.b32.xlu0 %v739, 64
  %v871 = vpop.permute.xlu0 %870
  %872 = vrot.lane.b32.xlu0 %v740, 64
  %v873 = vpop.permute.xlu0 %872
  %874 = vrot.lane.b32.xlu0 %v741, 64
  %v875 = vpop.permute.xlu0 %874
  %884 = vmatpush.msra.mxu0 0.0
  %885 = vmatpush.msra.mxu0 0.0
  %886 = vmatpush.msra.mxu0 0.0
  %887 = vmatpush.msra.mxu0 0.0
  %888 = vmatpush.msra.mxu0 0.0
  %889 = vmatpush.msra.mxu0 0.0
  %890 = vmatpush.msra.mxu0 0.0
  %891 = vmatpush.msra.mxu0 0.0
  %892 = vmatpush.msra.mxu0 %v875
  %893 = vmatpush.msra.mxu0 %v873
  %894 = vmatpush.msra.mxu0 %v871
  %895 = vmatpush.msra.mxu0 %v869
  %896 = vmatpush.msra.mxu0 %v867
  %897 = vmatpush.msra.mxu0 %v865
  %898 = vmatpush.msra.mxu0 %v863
  %899 = vmatpush.msra.mxu0 %v861
  %900 = vmatmul.f32.gmra.mxu0 %v824
  %v901 = vpop.f32.mrf.mxu0
  %v902 = vadd.f32 0.0, %v901
  %903 = vmatmul.f32.gmra.mxu0 %v827
  %v904 = vpop.f32.mrf.mxu0
  %v905 = vadd.f32 0.0, %v904
  %906 = vdwg.mxu0
  %v907 = vrcp.pop %v847
  %v908 = vmul.f32 %v847, %v907
  %v909 = vsub.f32 1.0, %v908
  %v910 = vmul.f32 %v907, %v909
  %v911 = vadd.f32 %v907, %v910
  %vm912 = vweird.f32 %v847
  %vm913 = vweird.f32 %v907
  %vm914 = vmor %vm912, %vm913
  %v915 = vsel %vm914, %v907, %v911
  %v916 = vand.u32 2147483647, %v847
  %vm917 = vcmp.eq.f32.partialorder %v916, 8.507059e+37
  %v918 = vand.u32 %v847, 2147483648
  %v919 = vor.u32 1.1754944e-38, %v918
  %v920 = vsel %vm917, %v919, %v915
  %v921 = vrcp.pop %v850
  %v922 = vmul.f32 %v850, %v921
  %v923 = vsub.f32 1.0, %v922
  %v924 = vmul.f32 %v921, %v923
  %v925 = vadd.f32 %v921, %v924
  %vm926 = vweird.f32 %v850
  %vm927 = vweird.f32 %v921
  %vm928 = vmor %vm926, %vm927
  %v929 = vsel %vm928, %v921, %v925
  %v930 = vand.u32 2147483647, %v850
  %vm931 = vcmp.eq.f32.partialorder %v930, 8.507059e+37
  %v932 = vand.u32 %v850, 2147483648
  %v933 = vor.u32 1.1754944e-38, %v932
  %v934 = vsel %vm931, %v933, %v929
  %v935 = vmul.f32 %v902, %v920
  %v936 = vmul.f32 %v905, %v934
  %v938 = vsel %vm188, %v935, 0
  %v941 = vsel %vm188, %v936, 0
  %943 = vmatpush.msra.mxu0 0.0
  %944 = vmatpush.msra.mxu0 0.0
  %945 = vmatpush.msra.mxu0 0.0
  %946 = vmatpush.msra.mxu0 0.0
  %947 = vmatpush.msra.mxu0 0.0
  %948 = vmatpush.msra.mxu0 0.0
  %949 = vmatpush.msra.mxu0 0.0
  %950 = vmatpush.msra.mxu0 0.0
  %951 = vmatpush.msra.mxu0 0.0
  %952 = vmatpush.msra.mxu0 0.0
  %953 = vmatpush.msra.mxu0 0.0
  %954 = vmatpush.msra.mxu0 0.0
  %955 = vmatpush.msra.mxu0 %v157
  %956 = vmatpush.msra.mxu0 %v156
  %957 = vmatpush.msra.mxu0 %v155
  %958 = vmatpush.msra.mxu0 %v154
  %959 = vmatmul.f32.gmra.mxu0 %v938
  %v960 = vpop.f32.mrf.mxu0
  %v961 = vadd.f32 %v487, %v960
  %962 = vmatmul.f32.gmra.mxu0 %v941
  %v963 = vpop.f32.mrf.mxu0
  %v964 = vadd.f32 %v487, %v963
  %965 = vdwg.mxu0
  %v966 = vadd.f32 %v695, %v961
  %v967 = vadd.f32 %v696, %v964
  %v968 = vsel %vm188, %v966, 0.0
  %969 = vadd.xlane.f32.xlu0 %v968
  %v970 = vpop.xlane.xlu0 %969
  %v971 = vsel %vm188, %v967, 0.0
  %972 = vadd.xlane.f32.xlu0 %v971
  %v973 = vpop.xlane.xlu0 %972
  %v974 = vmul.f32 %v970, %v532
  %v975 = vmul.f32 %v973, %v532
  %v976 = vsub.f32 %v966, %v974
  %v977 = vsub.f32 %v967, %v975
  %v978 = vmul.f32 %v976, %v976
  %v979 = vmul.f32 %v977, %v977
  %v980 = vsel %vm188, %v978, 0.0
  %981 = vadd.xlane.f32.xlu0 %v980
  %v982 = vpop.xlane.xlu0 %981
  %v983 = vsel %vm188, %v979, 0.0
  %984 = vadd.xlane.f32.xlu0 %v983
  %v985 = vpop.xlane.xlu0 %984
  %v986 = vmul.f32 %v982, %v532
  %v987 = vmul.f32 %v985, %v532
  %v988 = vadd.f32 %v986, 1e-05
  %v989 = vadd.f32 %v987, 1e-05
  %v990 = vrsqrt.pop %v988
  %v991 = vmul.f32 %v990, %v988
  %v992 = vmul.f32 %v991, %v990
  %v993 = vmul.f32 0.5, %v992
  %v994 = vsub.f32 1.5, %v993
  %v995 = vmul.f32 %v990, %v994
  %vm996 = vweird.f32 %v988
  %vm997 = vweird.f32 %v990
  %vm998 = vmor %vm996, %vm997
  %v999 = vsel %vm998, %v990, %v995
  %v1000 = vrsqrt.pop %v989
  %v1001 = vmul.f32 %v1000, %v989
  %v1002 = vmul.f32 %v1001, %v1000
  %v1003 = vmul.f32 0.5, %v1002
  %v1004 = vsub.f32 1.5, %v1003
  %v1005 = vmul.f32 %v1000, %v1004
  %vm1006 = vweird.f32 %v989
  %vm1007 = vweird.f32 %v1000
  %vm1008 = vmor %vm1006, %vm1007
  %v1009 = vsel %vm1008, %v1000, %v1005
  %v1010 = vmul.f32 %v976, %v999
  %v1011 = vmul.f32 %v977, %v1009
  %v1012 = vmul.f32 %v1010, %v572
  %v1013 = vmul.f32 %v1011, %v572
  %v1014 = vadd.f32 %v1012, %v577
  %v1015 = vadd.f32 %v1013, %v577
  %v1017 = vsel %vm188, %v1014, 0
  %v1020 = vsel %vm188, %v1015, 0
  %1022 = vmatpush.msra.mxu0 0.0
  %1023 = vmatpush.msra.mxu0 0.0
  %1024 = vmatpush.msra.mxu0 0.0
  %1025 = vmatpush.msra.mxu0 0.0
  %1026 = vmatpush.msra.mxu0 0.0
  %1027 = vmatpush.msra.mxu0 0.0
  %1028 = vmatpush.msra.mxu0 0.0
  %1029 = vmatpush.msra.mxu0 0.0
  %1030 = vmatpush.msra.mxu0 0.0
  %1031 = vmatpush.msra.mxu0 0.0
  %1032 = vmatpush.msra.mxu0 0.0
  %1033 = vmatpush.msra.mxu0 0.0
  %1034 = vmatpush.msra.mxu0 %v162
  %1035 = vmatpush.msra.mxu0 %v161
  %1036 = vmatpush.msra.mxu0 %v160
  %1037 = vmatpush.msra.mxu0 %v159
  %1038 = vmatmul.f32.gmra.mxu0 %v1017
  %v1039 = vpop.f32.mrf.mxu0
  %v1040 = vadd.f32 %v582, %v1039
  %1041 = vmatmul.f32.gmra.mxu0 %v1020
  %v1042 = vpop.f32.mrf.mxu0
  %v1043 = vadd.f32 %v582, %v1042
  %1044 = vdwg.mxu0
  %v1045 = vmax.f32 %v1040, 0.0
  %v1046 = vmax.f32 %v1043, 0.0
  %1047 = vmatpush.msra.mxu0 %v179
  %1048 = vmatpush.msra.mxu0 %v178
  %1049 = vmatpush.msra.mxu0 %v177
  %1050 = vmatpush.msra.mxu0 %v176
  %1051 = vmatpush.msra.mxu0 %v175
  %1052 = vmatpush.msra.mxu0 %v174
  %1053 = vmatpush.msra.mxu0 %v173
  %1054 = vmatpush.msra.mxu0 %v172
  %1055 = vmatpush.msra.mxu0 %v171
  %1056 = vmatpush.msra.mxu0 %v170
  %1057 = vmatpush.msra.mxu0 %v169
  %1058 = vmatpush.msra.mxu0 %v168
  %1059 = vmatpush.msra.mxu0 %v167
  %1060 = vmatpush.msra.mxu0 %v166
  %1061 = vmatpush.msra.mxu0 %v165
  %1062 = vmatpush.msra.mxu0 %v164
  %1063 = vmatmul.f32.gmra.mxu0 %v1045
  %v1064 = vpop.f32.mrf.mxu0
  %v1065 = vadd.f32 %v616, %v1064
  %1066 = vmatmul.f32.gmra.mxu0 %v1046
  %v1067 = vpop.f32.mrf.mxu0
  %v1068 = vadd.f32 %v616, %v1067
  %1069 = vdwg.mxu0
  %v1070 = vadd.f32 %v1014, %v1065
  %v1071 = vadd.f32 %v1015, %v1068
  %v1072 = vsel %vm188, %v1070, 0.0
  %1073 = vadd.xlane.f32.xlu0 %v1072
  %v1074 = vpop.xlane.xlu0 %1073
  %v1075 = vsel %vm188, %v1071, 0.0
  %1076 = vadd.xlane.f32.xlu0 %v1075
  %v1077 = vpop.xlane.xlu0 %1076
  %v1078 = vmul.f32 %v1074, %v532
  %v1079 = vmul.f32 %v1077, %v532
  %v1080 = vsub.f32 %v1070, %v1078
  %v1081 = vsub.f32 %v1071, %v1079
  %v1082 = vmul.f32 %v1080, %v1080
  %v1083 = vmul.f32 %v1081, %v1081
  %v1084 = vsel %vm188, %v1082, 0.0
  %1085 = vadd.xlane.f32.xlu0 %v1084
  %v1086 = vpop.xlane.xlu0 %1085
  %v1087 = vsel %vm188, %v1083, 0.0
  %1088 = vadd.xlane.f32.xlu0 %v1087
  %v1089 = vpop.xlane.xlu0 %1088
  %v1090 = vmul.f32 %v1086, %v532
  %v1091 = vmul.f32 %v1089, %v532
  %v1092 = vadd.f32 %v1090, 1e-05
  %v1093 = vadd.f32 %v1091, 1e-05
  %v1094 = vrsqrt.pop %v1092
  %v1095 = vmul.f32 %v1094, %v1092
  %v1096 = vmul.f32 %v1095, %v1094
  %v1097 = vmul.f32 0.5, %v1096
  %v1098 = vsub.f32 1.5, %v1097
  %v1099 = vmul.f32 %v1094, %v1098
  %vm1100 = vweird.f32 %v1092
  %vm1101 = vweird.f32 %v1094
  %vm1102 = vmor %vm1100, %vm1101
  %v1103 = vsel %vm1102, %v1094, %v1099
  %v1104 = vrsqrt.pop %v1093
  %v1105 = vmul.f32 %v1104, %v1093
  %v1106 = vmul.f32 %v1105, %v1104
  %v1107 = vmul.f32 0.5, %v1106
  %v1108 = vsub.f32 1.5, %v1107
  %v1109 = vmul.f32 %v1104, %v1108
  %vm1110 = vweird.f32 %v1093
  %vm1111 = vweird.f32 %v1104
  %vm1112 = vmor %vm1110, %vm1111
  %v1113 = vsel %vm1112, %v1104, %v1109
  %v1114 = vmul.f32 %v1080, %v1103
  %v1115 = vmul.f32 %v1081, %v1113
  %v1116 = vmul.f32 %v1114, %v688
  %v1117 = vmul.f32 %v1115, %v688
  %v1118 = vadd.f32 %v1116, %v693
  %v1119 = vadd.f32 %v1117, %v693
  %v1121 = vsel %vm188, %v1118, 0
  %v1124 = vsel %vm188, %v1119, 0
  %1126 = vmatpush.msra.mxu0 0.0
  %1127 = vmatpush.msra.mxu0 0.0
  %1128 = vmatpush.msra.mxu0 0.0
  %1129 = vmatpush.msra.mxu0 0.0
  %1130 = vmatpush.msra.mxu0 0.0
  %1131 = vmatpush.msra.mxu0 0.0
  %1132 = vmatpush.msra.mxu0 0.0
  %1133 = vmatpush.msra.mxu0 0.0
  %1134 = vmatpush.msra.mxu0 0.0
  %1135 = vmatpush.msra.mxu0 0.0
  %1136 = vmatpush.msra.mxu0 0.0
  %1137 = vmatpush.msra.mxu0 0.0
  %1138 = vmatpush.msra.mxu0 %v152
  %1139 = vmatpush.msra.mxu0 %v151
  %1140 = vmatpush.msra.mxu0 %v150
  %1141 = vmatpush.msra.mxu0 %v149
  %1142 = vmatmul.f32.gmra.mxu0 %v1121
  %v1143 = vpop.f32.mrf.mxu0
  %v1144 = vadd.f32 %v186, %v1143
  %1145 = vmatmul.f32.gmra.mxu0 %v1124
  %v1146 = vpop.f32.mrf.mxu0
  %v1147 = vadd.f32 %v186, %v1146
  %1148 = vdwg.mxu0
  %v1149 = vmul.f32 %v1144, %v227
  %v1150 = vmul.f32 %v1147, %v229
  %v1151 = vmul.f32 %v1144, %v231
  %v1152 = vmul.f32 %v1147, %v233
  %v1153 = vmul.f32 %v1144, %v235
  %v1154 = vmul.f32 %v1147, %v237
  %v1155 = vmul.f32 %v1144, %v239
  %v1156 = vmul.f32 %v1147, %v241
  %v1157 = vmul.f32 %v1144, %v259
  %v1158 = vmul.f32 %v1147, %v261
  %v1159 = vmul.f32 %v1144, %v263
  %v1160 = vmul.f32 %v1147, %v265
  %v1161 = vmul.f32 %v1144, %v267
  %v1162 = vmul.f32 %v1147, %v269
  %v1163 = vmul.f32 %v1144, %v271
  %v1164 = vmul.f32 %v1147, %v273
  %1173 = vrot.lane.b32.xlu0 %v1149, 96
  %v1174 = vpop.permute.xlu0 %1173
  %1175 = vrot.lane.b32.xlu0 %v1150, 96
  %v1176 = vpop.permute.xlu0 %1175
  %1177 = vrot.lane.b32.xlu0 %v1151, 96
  %v1178 = vpop.permute.xlu0 %1177
  %1179 = vrot.lane.b32.xlu0 %v1152, 96
  %v1180 = vpop.permute.xlu0 %1179
  %1181 = vrot.lane.b32.xlu0 %v1153, 96
  %v1182 = vpop.permute.xlu0 %1181
  %1183 = vrot.lane.b32.xlu0 %v1154, 96
  %v1184 = vpop.permute.xlu0 %1183
  %1185 = vrot.lane.b32.xlu0 %v1155, 96
  %v1186 = vpop.permute.xlu0 %1185
  %1187 = vrot.lane.b32.xlu0 %v1156, 96
  %v1188 = vpop.permute.xlu0 %1187
  %v1190 = vsel %vm188, %v1144, 0
  %v1193 = vsel %vm188, %v1147, 0
  %v1195 = vsel %vm188, %v1174, 0
  %v1197 = vsel %vm188, %v1176, 0
  %v1199 = vsel %vm188, %v1178, 0
  %v1201 = vsel %vm188, %v1180, 0
  %v1203 = vsel %vm188, %v1182, 0
  %v1205 = vsel %vm188, %v1184, 0
  %v1207 = vsel %vm188, %v1186, 0
  %v1209 = vsel %vm188, %v1188, 0
  %1211 = vmatpush.xpose.msra.mxu0 0.0
  %1212 = vmatpush.xpose.msra.mxu0 0.0
  %1213 = vmatpush.xpose.msra.mxu0 0.0
  %1214 = vmatpush.xpose.msra.mxu0 0.0
  %1215 = vmatpush.xpose.msra.mxu0 0.0
  %1216 = vmatpush.xpose.msra.mxu0 0.0
  %1217 = vmatpush.xpose.msra.mxu0 0.0
  %1218 = vmatpush.xpose.msra.mxu0 0.0
  %1219 = vmatpush.xpose.msra.mxu0 %v1209
  %1220 = vmatpush.xpose.msra.mxu0 %v1207
  %1221 = vmatpush.xpose.msra.mxu0 %v1205
  %1222 = vmatpush.xpose.msra.mxu0 %v1203
  %1223 = vmatpush.xpose.msra.mxu0 %v1201
  %1224 = vmatpush.xpose.msra.mxu0 %v1199
  %1225 = vmatpush.xpose.msra.mxu0 %v1197
  %1226 = vmatpush.xpose.msra.mxu0 %v1195
  %1227 = vmatmul.f32.gmra.mxu0 %v1190
  %v1228 = vpop.f32.mrf.mxu0
  %v1229 = vadd.f32 %v147, %v1228
  %1230 = vmatmul.f32.gmra.mxu0 %v1193
  %v1231 = vpop.f32.mrf.mxu0
  %v1232 = vadd.f32 %v148, %v1231
  %1233 = vdwg.mxu0
  %v1234 = vsel %vm359, %v1229, -inf
  %1235 = vmax.xlane.f32.xlu0 %v1234
  %v1236 = vpop.xlane.xlu0 %1235
  %v1237 = vsel %vm359, %v1232, -inf
  %1238 = vmax.xlane.f32.xlu0 %v1237
  %v1239 = vpop.xlane.xlu0 %1238
  %v1240 = vsub.f32 %v1229, %v1236
  %v1241 = vsub.f32 %v1232, %v1239
  %v1242 = vmul.f32 %v1240, 1.442695
  %v1243 = vpow.pop %v1242
  %v1244 = vmul.f32 %v1241, 1.442695
  %v1245 = vpow.pop %v1244
  %v1247 = vsel %vm359, %v1243, 0
  %v1250 = vsel %vm359, %v1245, 0
  %1252 = vmatpush.msra.mxu0 0.0
  %1253 = vmatpush.msra.mxu0 0.0
  %1254 = vmatpush.msra.mxu0 0.0
  %1255 = vmatpush.msra.mxu0 0.0
  %1256 = vmatpush.msra.mxu0 0.0
  %1257 = vmatpush.msra.mxu0 0.0
  %1258 = vmatpush.msra.mxu0 0.0
  %1259 = vmatpush.msra.mxu0 0.0
  %1260 = vmatpush.msra.mxu0 %v140
  %1261 = vmatpush.msra.mxu0 %v139
  %1262 = vmatpush.msra.mxu0 %v138
  %1263 = vmatpush.msra.mxu0 %v137
  %1264 = vmatpush.msra.mxu0 %v136
  %1265 = vmatpush.msra.mxu0 %v135
  %1266 = vmatpush.msra.mxu0 %v134
  %1267 = vmatpush.msra.mxu0 %v133
  %1268 = vmatmul.f32.gmra.mxu0 %v1247
  %v1269 = vpop.f32.mrf.mxu0
  %v1270 = vadd.f32 0.0, %v1269
  %1271 = vmatmul.f32.gmra.mxu0 %v1250
  %v1272 = vpop.f32.mrf.mxu0
  %v1273 = vadd.f32 0.0, %v1272
  %1274 = vdwg.mxu0
  %1283 = vrot.lane.b32.xlu0 %v1157, 64
  %v1284 = vpop.permute.xlu0 %1283
  %1285 = vrot.lane.b32.xlu0 %v1158, 64
  %v1286 = vpop.permute.xlu0 %1285
  %1287 = vrot.lane.b32.xlu0 %v1159, 64
  %v1288 = vpop.permute.xlu0 %1287
  %1289 = vrot.lane.b32.xlu0 %v1160, 64
  %v1290 = vpop.permute.xlu0 %1289
  %1291 = vrot.lane.b32.xlu0 %v1161, 64
  %v1292 = vpop.permute.xlu0 %1291
  %1293 = vrot.lane.b32.xlu0 %v1162, 64
  %v1294 = vpop.permute.xlu0 %1293
  %1295 = vrot.lane.b32.xlu0 %v1163, 64
  %v1296 = vpop.permute.xlu0 %1295
  %1297 = vrot.lane.b32.xlu0 %v1164, 64
  %v1298 = vpop.permute.xlu0 %1297
  %1307 = vmatpush.msra.mxu0 0.0
  %1308 = vmatpush.msra.mxu0 0.0
  %1309 = vmatpush.msra.mxu0 0.0
  %1310 = vmatpush.msra.mxu0 0.0
  %1311 = vmatpush.msra.mxu0 0.0
  %1312 = vmatpush.msra.mxu0 0.0
  %1313 = vmatpush.msra.mxu0 0.0
  %1314 = vmatpush.msra.mxu0 0.0
  %1315 = vmatpush.msra.mxu0 %v1298
  %1316 = vmatpush.msra.mxu0 %v1296
  %1317 = vmatpush.msra.mxu0 %v1294
  %1318 = vmatpush.msra.mxu0 %v1292
  %1319 = vmatpush.msra.mxu0 %v1290
  %1320 = vmatpush.msra.mxu0 %v1288
  %1321 = vmatpush.msra.mxu0 %v1286
  %1322 = vmatpush.msra.mxu0 %v1284
  %1323 = vmatmul.f32.gmra.mxu0 %v1247
  %v1324 = vpop.f32.mrf.mxu0
  %v1325 = vadd.f32 0.0, %v1324
  %1326 = vmatmul.f32.gmra.mxu0 %v1250
  %v1327 = vpop.f32.mrf.mxu0
  %v1328 = vadd.f32 0.0, %v1327
  %1329 = vdwg.mxu0
  %v1330 = vrcp.pop %v1270
  %v1331 = vmul.f32 %v1270, %v1330
  %v1332 = vsub.f32 1.0, %v1331
  %v1333 = vmul.f32 %v1330, %v1332
  %v1334 = vadd.f32 %v1330, %v1333
  %vm1335 = vweird.f32 %v1270
  %vm1336 = vweird.f32 %v1330
  %vm1337 = vmor %vm1335, %vm1336
  %v1338 = vsel %vm1337, %v1330, %v1334
  %v1339 = vand.u32 2147483647, %v1270
  %vm1340 = vcmp.eq.f32.partialorder %v1339, 8.507059e+37
  %v1341 = vand.u32 %v1270, 2147483648
  %v1342 = vor.u32 1.1754944e-38, %v1341
  %v1343 = vsel %vm1340, %v1342, %v1338
  %v1344 = vrcp.pop %v1273
  %v1345 = vmul.f32 %v1273, %v1344
  %v1346 = vsub.f32 1.0, %v1345
  %v1347 = vmul.f32 %v1344, %v1346
  %v1348 = vadd.f32 %v1344, %v1347
  %vm1349 = vweird.f32 %v1273
  %vm1350 = vweird.f32 %v1344
  %vm1351 = vmor %vm1349, %vm1350
  %v1352 = vsel %vm1351, %v1344, %v1348
  %v1353 = vand.u32 2147483647, %v1273
  %vm1354 = vcmp.eq.f32.partialorder %v1353, 8.507059e+37
  %v1355 = vand.u32 %v1273, 2147483648
  %v1356 = vor.u32 1.1754944e-38, %v1355
  %v1357 = vsel %vm1354, %v1356, %v1352
  %v1358 = vmul.f32 %v1325, %v1343
  %v1359 = vmul.f32 %v1328, %v1357
  %v1361 = vsel %vm188, %v1358, 0
  %v1364 = vsel %vm188, %v1359, 0
  %1366 = vmatpush.msra.mxu0 0.0
  %1367 = vmatpush.msra.mxu0 0.0
  %1368 = vmatpush.msra.mxu0 0.0
  %1369 = vmatpush.msra.mxu0 0.0
  %1370 = vmatpush.msra.mxu0 0.0
  %1371 = vmatpush.msra.mxu0 0.0
  %1372 = vmatpush.msra.mxu0 0.0
  %1373 = vmatpush.msra.mxu0 0.0
  %1374 = vmatpush.msra.mxu0 0.0
  %1375 = vmatpush.msra.mxu0 0.0
  %1376 = vmatpush.msra.mxu0 0.0
  %1377 = vmatpush.msra.mxu0 0.0
  %1378 = vmatpush.msra.mxu0 %v157
  %1379 = vmatpush.msra.mxu0 %v156
  %1380 = vmatpush.msra.mxu0 %v155
  %1381 = vmatpush.msra.mxu0 %v154
  %1382 = vmatmul.f32.gmra.mxu0 %v1361
  %v1383 = vpop.f32.mrf.mxu0
  %v1384 = vadd.f32 %v487, %v1383
  %1385 = vmatmul.f32.gmra.mxu0 %v1364
  %v1386 = vpop.f32.mrf.mxu0
  %v1387 = vadd.f32 %v487, %v1386
  %1388 = vdwg.mxu0
  %v1389 = vadd.f32 %v1118, %v1384
  %v1390 = vadd.f32 %v1119, %v1387
  %v1391 = vsel %vm188, %v1389, 0.0
  %1392 = vadd.xlane.f32.xlu0 %v1391
  %v1393 = vpop.xlane.xlu0 %1392
  %v1394 = vsel %vm188, %v1390, 0.0
  %1395 = vadd.xlane.f32.xlu0 %v1394
  %v1396 = vpop.xlane.xlu0 %1395
  %v1397 = vmul.f32 %v1393, %v532
  %v1398 = vmul.f32 %v1396, %v532
  %v1399 = vsub.f32 %v1389, %v1397
  %v1400 = vsub.f32 %v1390, %v1398
  %v1401 = vmul.f32 %v1399, %v1399
  %v1402 = vmul.f32 %v1400, %v1400
  %v1403 = vsel %vm188, %v1401, 0.0
  %1404 = vadd.xlane.f32.xlu0 %v1403
  %v1405 = vpop.xlane.xlu0 %1404
  %v1406 = vsel %vm188, %v1402, 0.0
  %1407 = vadd.xlane.f32.xlu0 %v1406
  %v1408 = vpop.xlane.xlu0 %1407
  %v1409 = vmul.f32 %v1405, %v532
  %v1410 = vmul.f32 %v1408, %v532
  %v1411 = vadd.f32 %v1409, 1e-05
  %v1412 = vadd.f32 %v1410, 1e-05
  %v1413 = vrsqrt.pop %v1411
  %v1414 = vmul.f32 %v1413, %v1411
  %v1415 = vmul.f32 %v1414, %v1413
  %v1416 = vmul.f32 0.5, %v1415
  %v1417 = vsub.f32 1.5, %v1416
  %v1418 = vmul.f32 %v1413, %v1417
  %vm1419 = vweird.f32 %v1411
  %vm1420 = vweird.f32 %v1413
  %vm1421 = vmor %vm1419, %vm1420
  %v1422 = vsel %vm1421, %v1413, %v1418
  %v1423 = vrsqrt.pop %v1412
  %v1424 = vmul.f32 %v1423, %v1412
  %v1425 = vmul.f32 %v1424, %v1423
  %v1426 = vmul.f32 0.5, %v1425
  %v1427 = vsub.f32 1.5, %v1426
  %v1428 = vmul.f32 %v1423, %v1427
  %vm1429 = vweird.f32 %v1412
  %vm1430 = vweird.f32 %v1423
  %vm1431 = vmor %vm1429, %vm1430
  %v1432 = vsel %vm1431, %v1423, %v1428
  %v1433 = vmul.f32 %v1399, %v1422
  %v1434 = vmul.f32 %v1400, %v1432
  %v1435 = vmul.f32 %v1433, %v572
  %v1436 = vmul.f32 %v1434, %v572
  %v1437 = vadd.f32 %v1435, %v577
  %v1438 = vadd.f32 %v1436, %v577
  %v1440 = vsel %vm188, %v1437, 0
  %v1443 = vsel %vm188, %v1438, 0
  %1445 = vmatpush.msra.mxu0 0.0
  %1446 = vmatpush.msra.mxu0 0.0
  %1447 = vmatpush.msra.mxu0 0.0
  %1448 = vmatpush.msra.mxu0 0.0
  %1449 = vmatpush.msra.mxu0 0.0
  %1450 = vmatpush.msra.mxu0 0.0
  %1451 = vmatpush.msra.mxu0 0.0
  %1452 = vmatpush.msra.mxu0 0.0
  %1453 = vmatpush.msra.mxu0 0.0
  %1454 = vmatpush.msra.mxu0 0.0
  %1455 = vmatpush.msra.mxu0 0.0
  %1456 = vmatpush.msra.mxu0 0.0
  %1457 = vmatpush.msra.mxu0 %v162
  %1458 = vmatpush.msra.mxu0 %v161
  %1459 = vmatpush.msra.mxu0 %v160
  %1460 = vmatpush.msra.mxu0 %v159
  %1461 = vmatmul.f32.gmra.mxu0 %v1440
  %v1462 = vpop.f32.mrf.mxu0
  %v1463 = vadd.f32 %v582, %v1462
  %1464 = vmatmul.f32.gmra.mxu0 %v1443
  %v1465 = vpop.f32.mrf.mxu0
  %v1466 = vadd.f32 %v582, %v1465
  %1467 = vdwg.mxu0
  %v1468 = vmax.f32 %v1463, 0.0
  %v1469 = vmax.f32 %v1466, 0.0
  %1470 = vmatpush.msra.mxu0 %v179
  %1471 = vmatpush.msra.mxu0 %v178
  %1472 = vmatpush.msra.mxu0 %v177
  %1473 = vmatpush.msra.mxu0 %v176
  %1474 = vmatpush.msra.mxu0 %v175
  %1475 = vmatpush.msra.mxu0 %v174
  %1476 = vmatpush.msra.mxu0 %v173
  %1477 = vmatpush.msra.mxu0 %v172
  %1478 = vmatpush.msra.mxu0 %v171
  %1479 = vmatpush.msra.mxu0 %v170
  %1480 = vmatpush.msra.mxu0 %v169
  %1481 = vmatpush.msra.mxu0 %v168
  %1482 = vmatpush.msra.mxu0 %v167
  %1483 = vmatpush.msra.mxu0 %v166
  %1484 = vmatpush.msra.mxu0 %v165
  %1485 = vmatpush.msra.mxu0 %v164
  %1486 = vmatmul.f32.gmra.mxu0 %v1468
  %v1487 = vpop.f32.mrf.mxu0
  %v1488 = vadd.f32 %v616, %v1487
  %1489 = vmatmul.f32.gmra.mxu0 %v1469
  %v1490 = vpop.f32.mrf.mxu0
  %v1491 = vadd.f32 %v616, %v1490
  %1492 = vdwg.mxu0
  %v1493 = vadd.f32 %v1437, %v1488
  %v1494 = vadd.f32 %v1438, %v1491
  %v1495 = vsel %vm188, %v1493, 0.0
  %1496 = vadd.xlane.f32.xlu0 %v1495
  %v1497 = vpop.xlane.xlu0 %1496
  %v1498 = vsel %vm188, %v1494, 0.0
  %1499 = vadd.xlane.f32.xlu0 %v1498
  %v1500 = vpop.xlane.xlu0 %1499
  %v1501 = vmul.f32 %v1497, %v532
  %v1502 = vmul.f32 %v1500, %v532
  %v1503 = vsub.f32 %v1493, %v1501
  %v1504 = vsub.f32 %v1494, %v1502
  %v1505 = vmul.f32 %v1503, %v1503
  %v1506 = vmul.f32 %v1504, %v1504
  %v1507 = vsel %vm188, %v1505, 0.0
  %1508 = vadd.xlane.f32.xlu0 %v1507
  %v1509 = vpop.xlane.xlu0 %1508
  %v1510 = vsel %vm188, %v1506, 0.0
  %1511 = vadd.xlane.f32.xlu0 %v1510
  %v1512 = vpop.xlane.xlu0 %1511
  %v1513 = vmul.f32 %v1509, %v532
  %v1514 = vmul.f32 %v1512, %v532
  %v1515 = vadd.f32 %v1513, 1e-05
  %v1516 = vadd.f32 %v1514, 1e-05
  %v1517 = vrsqrt.pop %v1515
  %v1518 = vmul.f32 %v1517, %v1515
  %v1519 = vmul.f32 %v1518, %v1517
  %v1520 = vmul.f32 0.5, %v1519
  %v1521 = vsub.f32 1.5, %v1520
  %v1522 = vmul.f32 %v1517, %v1521
  %vm1523 = vweird.f32 %v1515
  %vm1524 = vweird.f32 %v1517
  %vm1525 = vmor %vm1523, %vm1524
  %v1526 = vsel %vm1525, %v1517, %v1522
  %v1527 = vrsqrt.pop %v1516
  %v1528 = vmul.f32 %v1527, %v1516
  %v1529 = vmul.f32 %v1528, %v1527
  %v1530 = vmul.f32 0.5, %v1529
  %v1531 = vsub.f32 1.5, %v1530
  %v1532 = vmul.f32 %v1527, %v1531
  %vm1533 = vweird.f32 %v1516
  %vm1534 = vweird.f32 %v1527
  %vm1535 = vmor %vm1533, %vm1534
  %v1536 = vsel %vm1535, %v1527, %v1532
  %v1537 = vmul.f32 %v1503, %v1526
  %v1538 = vmul.f32 %v1504, %v1536
  %v1539 = vmul.f32 %v1537, %v688
  %v1540 = vmul.f32 %v1538, %v688
  %v1541 = vadd.f32 %v1539, %v693
  %v1542 = vadd.f32 %v1540, %v693
  %v1544 = vsel %vm188, %v1541, 0
  %v1547 = vsel %vm188, %v1542, 0
  %1549 = vmatpush.msra.mxu0 0.0
  %1550 = vmatpush.msra.mxu0 0.0
  %1551 = vmatpush.msra.mxu0 0.0
  %1552 = vmatpush.msra.mxu0 0.0
  %1553 = vmatpush.msra.mxu0 0.0
  %1554 = vmatpush.msra.mxu0 0.0
  %1555 = vmatpush.msra.mxu0 0.0
  %1556 = vmatpush.msra.mxu0 0.0
  %1557 = vmatpush.msra.mxu0 0.0
  %1558 = vmatpush.msra.mxu0 0.0
  %1559 = vmatpush.msra.mxu0 0.0
  %1560 = vmatpush.msra.mxu0 0.0
  %1561 = vmatpush.msra.mxu0 %v152
  %1562 = vmatpush.msra.mxu0 %v151
  %1563 = vmatpush.msra.mxu0 %v150
  %1564 = vmatpush.msra.mxu0 %v149
  %1565 = vmatmul.f32.gmra.mxu0 %v1544
  %v1566 = vpop.f32.mrf.mxu0
  %v1567 = vadd.f32 %v186, %v1566
  %1568 = vmatmul.f32.gmra.mxu0 %v1547
  %v1569 = vpop.f32.mrf.mxu0
  %v1570 = vadd.f32 %v186, %v1569
  %1571 = vdwg.mxu0
  %v1572 = vmul.f32 %v1567, %v227
  %v1573 = vmul.f32 %v1570, %v229
  %v1574 = vmul.f32 %v1567, %v231
  %v1575 = vmul.f32 %v1570, %v233
  %v1576 = vmul.f32 %v1567, %v235
  %v1577 = vmul.f32 %v1570, %v237
  %v1578 = vmul.f32 %v1567, %v239
  %v1579 = vmul.f32 %v1570, %v241
  %v1580 = vmul.f32 %v1567, %v259
  %v1581 = vmul.f32 %v1570, %v261
  %v1582 = vmul.f32 %v1567, %v263
  %v1583 = vmul.f32 %v1570, %v265
  %v1584 = vmul.f32 %v1567, %v267
  %v1585 = vmul.f32 %v1570, %v269
  %v1586 = vmul.f32 %v1567, %v271
  %v1587 = vmul.f32 %v1570, %v273
  %1596 = vrot.lane.b32.xlu0 %v1572, 96
  %v1597 = vpop.permute.xlu0 %1596
  %1598 = vrot.lane.b32.xlu0 %v1573, 96
  %v1599 = vpop.permute.xlu0 %1598
  %1600 = vrot.lane.b32.xlu0 %v1574, 96
  %v1601 = vpop.permute.xlu0 %1600
  %1602 = vrot.lane.b32.xlu0 %v1575, 96
  %v1603 = vpop.permute.xlu0 %1602
  %1604 = vrot.lane.b32.xlu0 %v1576, 96
  %v1605 = vpop.permute.xlu0 %1604
  %1606 = vrot.lane.b32.xlu0 %v1577, 96
  %v1607 = vpop.permute.xlu0 %1606
  %1608 = vrot.lane.b32.xlu0 %v1578, 96
  %v1609 = vpop.permute.xlu0 %1608
  %1610 = vrot.lane.b32.xlu0 %v1579, 96
  %v1611 = vpop.permute.xlu0 %1610
  %v1613 = vsel %vm188, %v1567, 0
  %v1616 = vsel %vm188, %v1570, 0
  %v1618 = vsel %vm188, %v1597, 0
  %v1620 = vsel %vm188, %v1599, 0
  %v1622 = vsel %vm188, %v1601, 0
  %v1624 = vsel %vm188, %v1603, 0
  %v1626 = vsel %vm188, %v1605, 0
  %v1628 = vsel %vm188, %v1607, 0
  %v1630 = vsel %vm188, %v1609, 0
  %v1632 = vsel %vm188, %v1611, 0
  %1634 = vmatpush.xpose.msra.mxu0 0.0
  %1635 = vmatpush.xpose.msra.mxu0 0.0
  %1636 = vmatpush.xpose.msra.mxu0 0.0
  %1637 = vmatpush.xpose.msra.mxu0 0.0
  %1638 = vmatpush.xpose.msra.mxu0 0.0
  %1639 = vmatpush.xpose.msra.mxu0 0.0
  %1640 = vmatpush.xpose.msra.mxu0 0.0
  %1641 = vmatpush.xpose.msra.mxu0 0.0
  %1642 = vmatpush.xpose.msra.mxu0 %v1632
  %1643 = vmatpush.xpose.msra.mxu0 %v1630
  %1644 = vmatpush.xpose.msra.mxu0 %v1628
  %1645 = vmatpush.xpose.msra.mxu0 %v1626
  %1646 = vmatpush.xpose.msra.mxu0 %v1624
  %1647 = vmatpush.xpose.msra.mxu0 %v1622
  %1648 = vmatpush.xpose.msra.mxu0 %v1620
  %1649 = vmatpush.xpose.msra.mxu0 %v1618
  %1650 = vmatmul.f32.gmra.mxu0 %v1613
  %v1651 = vpop.f32.mrf.mxu0
  %v1652 = vadd.f32 %v147, %v1651
  %1653 = vmatmul.f32.gmra.mxu0 %v1616
  %v1654 = vpop.f32.mrf.mxu0
  %v1655 = vadd.f32 %v148, %v1654
  %1656 = vdwg.mxu0
  %v1657 = vsel %vm359, %v1652, -inf
  %1658 = vmax.xlane.f32.xlu0 %v1657
  %v1659 = vpop.xlane.xlu0 %1658
  %v1660 = vsel %vm359, %v1655, -inf
  %1661 = vmax.xlane.f32.xlu0 %v1660
  %v1662 = vpop.xlane.xlu0 %1661
  %v1663 = vsub.f32 %v1652, %v1659
  %v1664 = vsub.f32 %v1655, %v1662
  %v1665 = vmul.f32 %v1663, 1.442695
  %v1666 = vpow.pop %v1665
  %v1667 = vmul.f32 %v1664, 1.442695
  %v1668 = vpow.pop %v1667
  %v1670 = vsel %vm359, %v1666, 0
  %v1673 = vsel %vm359, %v1668, 0
  %1675 = vmatpush.msra.mxu0 0.0
  %1676 = vmatpush.msra.mxu0 0.0
  %1677 = vmatpush.msra.mxu0 0.0
  %1678 = vmatpush.msra.mxu0 0.0
  %1679 = vmatpush.msra.mxu0 0.0
  %1680 = vmatpush.msra.mxu0 0.0
  %1681 = vmatpush.msra.mxu0 0.0
  %1682 = vmatpush.msra.mxu0 0.0
  %1683 = vmatpush.msra.mxu0 %v140
  %1684 = vmatpush.msra.mxu0 %v139
  %1685 = vmatpush.msra.mxu0 %v138
  %1686 = vmatpush.msra.mxu0 %v137
  %1687 = vmatpush.msra.mxu0 %v136
  %1688 = vmatpush.msra.mxu0 %v135
  %1689 = vmatpush.msra.mxu0 %v134
  %1690 = vmatpush.msra.mxu0 %v133
  %1691 = vmatmul.f32.gmra.mxu0 %v1670
  %v1692 = vpop.f32.mrf.mxu0
  %v1693 = vadd.f32 0.0, %v1692
  %1694 = vmatmul.f32.gmra.mxu0 %v1673
  %v1695 = vpop.f32.mrf.mxu0
  %v1696 = vadd.f32 0.0, %v1695
  %1697 = vdwg.mxu0
  %1706 = vrot.lane.b32.xlu0 %v1580, 64
  %v1707 = vpop.permute.xlu0 %1706
  %1708 = vrot.lane.b32.xlu0 %v1581, 64
  %v1709 = vpop.permute.xlu0 %1708
  %1710 = vrot.lane.b32.xlu0 %v1582, 64
  %v1711 = vpop.permute.xlu0 %1710
  %1712 = vrot.lane.b32.xlu0 %v1583, 64
  %v1713 = vpop.permute.xlu0 %1712
  %1714 = vrot.lane.b32.xlu0 %v1584, 64
  %v1715 = vpop.permute.xlu0 %1714
  %1716 = vrot.lane.b32.xlu0 %v1585, 64
  %v1717 = vpop.permute.xlu0 %1716
  %1718 = vrot.lane.b32.xlu0 %v1586, 64
  %v1719 = vpop.permute.xlu0 %1718
  %1720 = vrot.lane.b32.xlu0 %v1587, 64
  %v1721 = vpop.permute.xlu0 %1720
  %1730 = vmatpush.msra.mxu0 0.0
  %1731 = vmatpush.msra.mxu0 0.0
  %1732 = vmatpush.msra.mxu0 0.0
  %1733 = vmatpush.msra.mxu0 0.0
  %1734 = vmatpush.msra.mxu0 0.0
  %1735 = vmatpush.msra.mxu0 0.0
  %1736 = vmatpush.msra.mxu0 0.0
  %1737 = vmatpush.msra.mxu0 0.0
  %1738 = vmatpush.msra.mxu0 %v1721
  %1739 = vmatpush.msra.mxu0 %v1719
  %1740 = vmatpush.msra.mxu0 %v1717
  %1741 = vmatpush.msra.mxu0 %v1715
  %1742 = vmatpush.msra.mxu0 %v1713
  %1743 = vmatpush.msra.mxu0 %v1711
  %1744 = vmatpush.msra.mxu0 %v1709
  %1745 = vmatpush.msra.mxu0 %v1707
  %1746 = vmatmul.f32.gmra.mxu0 %v1670
  %v1747 = vpop.f32.mrf.mxu0
  %v1748 = vadd.f32 0.0, %v1747
  %1749 = vmatmul.f32.gmra.mxu0 %v1673
  %v1750 = vpop.f32.mrf.mxu0
  %v1751 = vadd.f32 0.0, %v1750
  %1752 = vdwg.mxu0
  %v1753 = vrcp.pop %v1693
  %v1754 = vmul.f32 %v1693, %v1753
  %v1755 = vsub.f32 1.0, %v1754
  %v1756 = vmul.f32 %v1753, %v1755
  %v1757 = vadd.f32 %v1753, %v1756
  %vm1758 = vweird.f32 %v1693
  %vm1759 = vweird.f32 %v1753
  %vm1760 = vmor %vm1758, %vm1759
  %v1761 = vsel %vm1760, %v1753, %v1757
  %v1762 = vand.u32 2147483647, %v1693
  %vm1763 = vcmp.eq.f32.partialorder %v1762, 8.507059e+37
  %v1764 = vand.u32 %v1693, 2147483648
  %v1765 = vor.u32 1.1754944e-38, %v1764
  %v1766 = vsel %vm1763, %v1765, %v1761
  %v1767 = vrcp.pop %v1696
  %v1768 = vmul.f32 %v1696, %v1767
  %v1769 = vsub.f32 1.0, %v1768
  %v1770 = vmul.f32 %v1767, %v1769
  %v1771 = vadd.f32 %v1767, %v1770
  %vm1772 = vweird.f32 %v1696
  %vm1773 = vweird.f32 %v1767
  %vm1774 = vmor %vm1772, %vm1773
  %v1775 = vsel %vm1774, %v1767, %v1771
  %v1776 = vand.u32 2147483647, %v1696
  %vm1777 = vcmp.eq.f32.partialorder %v1776, 8.507059e+37
  %v1778 = vand.u32 %v1696, 2147483648
  %v1779 = vor.u32 1.1754944e-38, %v1778
  %v1780 = vsel %vm1777, %v1779, %v1775
  %v1781 = vmul.f32 %v1748, %v1766
  %v1782 = vmul.f32 %v1751, %v1780
  %v1784 = vsel %vm188, %v1781, 0
  %v1787 = vsel %vm188, %v1782, 0
  %1789 = vmatpush.msra.mxu0 0.0
  %1790 = vmatpush.msra.mxu0 0.0
  %1791 = vmatpush.msra.mxu0 0.0
  %1792 = vmatpush.msra.mxu0 0.0
  %1793 = vmatpush.msra.mxu0 0.0
  %1794 = vmatpush.msra.mxu0 0.0
  %1795 = vmatpush.msra.mxu0 0.0
  %1796 = vmatpush.msra.mxu0 0.0
  %1797 = vmatpush.msra.mxu0 0.0
  %1798 = vmatpush.msra.mxu0 0.0
  %1799 = vmatpush.msra.mxu0 0.0
  %1800 = vmatpush.msra.mxu0 0.0
  %1801 = vmatpush.msra.mxu0 %v157
  %1802 = vmatpush.msra.mxu0 %v156
  %1803 = vmatpush.msra.mxu0 %v155
  %1804 = vmatpush.msra.mxu0 %v154
  %1805 = vmatmul.f32.gmra.mxu0 %v1784
  %v1806 = vpop.f32.mrf.mxu0
  %v1807 = vadd.f32 %v487, %v1806
  %1808 = vmatmul.f32.gmra.mxu0 %v1787
  %v1809 = vpop.f32.mrf.mxu0
  %v1810 = vadd.f32 %v487, %v1809
  %1811 = vdwg.mxu0
  %v1812 = vadd.f32 %v1541, %v1807
  %v1813 = vadd.f32 %v1542, %v1810
  %v1814 = vsel %vm188, %v1812, 0.0
  %1815 = vadd.xlane.f32.xlu0 %v1814
  %v1816 = vpop.xlane.xlu0 %1815
  %v1817 = vsel %vm188, %v1813, 0.0
  %1818 = vadd.xlane.f32.xlu0 %v1817
  %v1819 = vpop.xlane.xlu0 %1818
  %v1820 = vmul.f32 %v1816, %v532
  %v1821 = vmul.f32 %v1819, %v532
  %v1822 = vsub.f32 %v1812, %v1820
  %v1823 = vsub.f32 %v1813, %v1821
  %v1824 = vmul.f32 %v1822, %v1822
  %v1825 = vmul.f32 %v1823, %v1823
  %v1826 = vsel %vm188, %v1824, 0.0
  %1827 = vadd.xlane.f32.xlu0 %v1826
  %v1828 = vpop.xlane.xlu0 %1827
  %v1829 = vsel %vm188, %v1825, 0.0
  %1830 = vadd.xlane.f32.xlu0 %v1829
  %v1831 = vpop.xlane.xlu0 %1830
  %v1832 = vmul.f32 %v1828, %v532
  %v1833 = vmul.f32 %v1831, %v532
  %v1834 = vadd.f32 %v1832, 1e-05
  %v1835 = vadd.f32 %v1833, 1e-05
  %v1836 = vrsqrt.pop %v1834
  %v1837 = vmul.f32 %v1836, %v1834
  %v1838 = vmul.f32 %v1837, %v1836
  %v1839 = vmul.f32 0.5, %v1838
  %v1840 = vsub.f32 1.5, %v1839
  %v1841 = vmul.f32 %v1836, %v1840
  %vm1842 = vweird.f32 %v1834
  %vm1843 = vweird.f32 %v1836
  %vm1844 = vmor %vm1842, %vm1843
  %v1845 = vsel %vm1844, %v1836, %v1841
  %v1846 = vrsqrt.pop %v1835
  %v1847 = vmul.f32 %v1846, %v1835
  %v1848 = vmul.f32 %v1847, %v1846
  %v1849 = vmul.f32 0.5, %v1848
  %v1850 = vsub.f32 1.5, %v1849
  %v1851 = vmul.f32 %v1846, %v1850
  %vm1852 = vweird.f32 %v1835
  %vm1853 = vweird.f32 %v1846
  %vm1854 = vmor %vm1852, %vm1853
  %v1855 = vsel %vm1854, %v1846, %v1851
  %v1856 = vmul.f32 %v1822, %v1845
  %v1857 = vmul.f32 %v1823, %v1855
  %v1858 = vmul.f32 %v1856, %v572
  %v1859 = vmul.f32 %v1857, %v572
  %v1860 = vadd.f32 %v1858, %v577
  %v1861 = vadd.f32 %v1859, %v577
  %v1863 = vsel %vm188, %v1860, 0
  %v1866 = vsel %vm188, %v1861, 0
  %1868 = vmatpush.msra.mxu0 0.0
  %1869 = vmatpush.msra.mxu0 0.0
  %1870 = vmatpush.msra.mxu0 0.0
  %1871 = vmatpush.msra.mxu0 0.0
  %1872 = vmatpush.msra.mxu0 0.0
  %1873 = vmatpush.msra.mxu0 0.0
  %1874 = vmatpush.msra.mxu0 0.0
  %1875 = vmatpush.msra.mxu0 0.0
  %1876 = vmatpush.msra.mxu0 0.0
  %1877 = vmatpush.msra.mxu0 0.0
  %1878 = vmatpush.msra.mxu0 0.0
  %1879 = vmatpush.msra.mxu0 0.0
  %1880 = vmatpush.msra.mxu0 %v162
  %1881 = vmatpush.msra.mxu0 %v161
  %1882 = vmatpush.msra.mxu0 %v160
  %1883 = vmatpush.msra.mxu0 %v159
  %1884 = vmatmul.f32.gmra.mxu0 %v1863
  %v1885 = vpop.f32.mrf.mxu0
  %v1886 = vadd.f32 %v582, %v1885
  %1887 = vmatmul.f32.gmra.mxu0 %v1866
  %v1888 = vpop.f32.mrf.mxu0
  %v1889 = vadd.f32 %v582, %v1888
  %1890 = vdwg.mxu0
  %v1891 = vmax.f32 %v1886, 0.0
  %v1892 = vmax.f32 %v1889, 0.0
  %1893 = vmatpush.msra.mxu0 %v179
  %1894 = vmatpush.msra.mxu0 %v178
  %1895 = vmatpush.msra.mxu0 %v177
  %1896 = vmatpush.msra.mxu0 %v176
  %1897 = vmatpush.msra.mxu0 %v175
  %1898 = vmatpush.msra.mxu0 %v174
  %1899 = vmatpush.msra.mxu0 %v173
  %1900 = vmatpush.msra.mxu0 %v172
  %1901 = vmatpush.msra.mxu0 %v171
  %1902 = vmatpush.msra.mxu0 %v170
  %1903 = vmatpush.msra.mxu0 %v169
  %1904 = vmatpush.msra.mxu0 %v168
  %1905 = vmatpush.msra.mxu0 %v167
  %1906 = vmatpush.msra.mxu0 %v166
  %1907 = vmatpush.msra.mxu0 %v165
  %1908 = vmatpush.msra.mxu0 %v164
  %1909 = vmatmul.f32.gmra.mxu0 %v1891
  %v1910 = vpop.f32.mrf.mxu0
  %v1911 = vadd.f32 %v616, %v1910
  %1912 = vmatmul.f32.gmra.mxu0 %v1892
  %v1913 = vpop.f32.mrf.mxu0
  %v1914 = vadd.f32 %v616, %v1913
  %1915 = vdwg.mxu0
  %v1916 = vadd.f32 %v1860, %v1911
  %v1917 = vadd.f32 %v1861, %v1914
  %v1918 = vsel %vm188, %v1916, 0.0
  %1919 = vadd.xlane.f32.xlu0 %v1918
  %v1920 = vpop.xlane.xlu0 %1919
  %v1921 = vsel %vm188, %v1917, 0.0
  %1922 = vadd.xlane.f32.xlu0 %v1921
  %v1923 = vpop.xlane.xlu0 %1922
  %v1924 = vmul.f32 %v1920, %v532
  %v1925 = vmul.f32 %v1923, %v532
  %v1926 = vsub.f32 %v1916, %v1924
  %v1927 = vsub.f32 %v1917, %v1925
  %v1928 = vmul.f32 %v1926, %v1926
  %v1929 = vmul.f32 %v1927, %v1927
  %v1930 = vsel %vm188, %v1928, 0.0
  %1931 = vadd.xlane.f32.xlu0 %v1930
  %v1932 = vpop.xlane.xlu0 %1931
  %v1933 = vsel %vm188, %v1929, 0.0
  %1934 = vadd.xlane.f32.xlu0 %v1933
  %v1935 = vpop.xlane.xlu0 %1934
  %v1936 = vmul.f32 %v1932, %v532
  %v1937 = vmul.f32 %v1935, %v532
  %v1938 = vadd.f32 %v1936, 1e-05
  %v1939 = vadd.f32 %v1937, 1e-05
  %v1940 = vrsqrt.pop %v1938
  %v1941 = vmul.f32 %v1940, %v1938
  %v1942 = vmul.f32 %v1941, %v1940
  %v1943 = vmul.f32 0.5, %v1942
  %v1944 = vsub.f32 1.5, %v1943
  %v1945 = vmul.f32 %v1940, %v1944
  %vm1946 = vweird.f32 %v1938
  %vm1947 = vweird.f32 %v1940
  %vm1948 = vmor %vm1946, %vm1947
  %v1949 = vsel %vm1948, %v1940, %v1945
  %v1950 = vrsqrt.pop %v1939
  %v1951 = vmul.f32 %v1950, %v1939
  %v1952 = vmul.f32 %v1951, %v1950
  %v1953 = vmul.f32 0.5, %v1952
  %v1954 = vsub.f32 1.5, %v1953
  %v1955 = vmul.f32 %v1950, %v1954
  %vm1956 = vweird.f32 %v1939
  %vm1957 = vweird.f32 %v1950
  %vm1958 = vmor %vm1956, %vm1957
  %v1959 = vsel %vm1958, %v1950, %v1955
  %v1960 = vmul.f32 %v1926, %v1949
  %v1961 = vmul.f32 %v1927, %v1959
  %v1962 = vmul.f32 %v1960, %v688
  %v1963 = vmul.f32 %v1961, %v688
  %v1964 = vadd.f32 %v1962, %v693
  %v1965 = vadd.f32 %v1963, %v693
  %v1966 = vld [vmem:[%s15] sm:$0xff]
  %v1967 = vld [vmem:[%s15 + $0x8] sm:$0xff]
  %v1968 = vld [vmem:[%s15 + $0x10] sm:$0xff]
  %v1969 = vld [vmem:[%s15 + $0x18] sm:$0xff]
  %v1970 = vld [vmem:[%s16] sm:$0x1]
  %v1972 = vperm.slane %v1970, 0
  %v1975 = vsel %vm188, %v1964, 0
  %v1978 = vsel %vm188, %v1965, 0
  %1980 = vmatpush.msra.mxu0 0.0
  %1981 = vmatpush.msra.mxu0 0.0
  %1982 = vmatpush.msra.mxu0 0.0
  %1983 = vmatpush.msra.mxu0 0.0
  %1984 = vmatpush.msra.mxu0 0.0
  %1985 = vmatpush.msra.mxu0 0.0
  %1986 = vmatpush.msra.mxu0 0.0
  %1987 = vmatpush.msra.mxu0 0.0
  %1988 = vmatpush.msra.mxu0 0.0
  %1989 = vmatpush.msra.mxu0 0.0
  %1990 = vmatpush.msra.mxu0 0.0
  %1991 = vmatpush.msra.mxu0 0.0
  %1992 = vmatpush.msra.mxu0 %v1969
  %1993 = vmatpush.msra.mxu0 %v1968
  %1994 = vmatpush.msra.mxu0 %v1967
  %1995 = vmatpush.msra.mxu0 %v1966
  %1996 = vmatmul.f32.gmra.mxu0 %v1975
  %v1997 = vpop.f32.mrf.mxu0
  %v1998 = vadd.f32 %v1972, %v1997
  %1999 = vmatmul.f32.gmra.mxu0 %v1978
  %v2000 = vpop.f32.mrf.mxu0
  %v2001 = vadd.f32 %v1972, %v2000
  %2002 = vdwg.mxu0
  %2003 = vst.msk [vmem:[%s17] sm:$0xff] %vm188, %v1998
  %2004 = vst.msk [vmem:[%s17 + $0x8] sm:$0xff] %vm188, %v2001
  // Predicated region
  $region70: #{sequence_forward.1} parent=0 // pred_check
    _
  $region71: #{sequence_forward.1} parent=0 // pred_check_branch
    %2006 = sbr.rel (0) target = $region73
  $region72: #{sequence_forward.1} parent=0 // pred_region
    _
  $region73: #{sequence_forward.1} parent=0 // pred_fallthru
    _
  // Predicated region
  $region74: #{sequence_forward.1} parent=0 // pred_check
    _
  $region75: #{sequence_forward.1} parent=0 // pred_check_branch
    %2008 = sbr.rel (0) target = $region77
  $region76: #{sequence_forward.1} parent=0 // pred_region
    _
  $region77: #{sequence_forward.1} parent=0 // pred_fallthru
    _

</llo_original>
